<compile_context>
chip_gen: v7x
topology: tpu7x:2x2x1
jax: 0.10.0
libtpu: 0.0.40
codegen_flags: <defaults>
</compile_context>

<pallas_src>
import numpy as np
import jax
import jax.numpy as jnp
from jax.experimental import pallas as pl
from jax.experimental.pallas import tpu as pltpu


# ---------------- fused Pallas kernel (TB batch elements per grid step) ----------------

def _convnet_fused_kernel(x_ref, w3_ref, cb_ref, fw_ref, fb_ref, o_ref, conv_scr):
    # x_ref   : (1, Ho*TB, KH*W*Cin)  halo'd input block, row index = y*TB + b_local
    # w3_ref  : (KH*W*Cin, Wo*Cout)   banded conv weight (all kernel rows fused, K = 144)
    # cb_ref  : (1, Wo*Cout)          conv bias tiled over output x
    # fw_ref  : (Ho, Wo*Cout, F_out)  FC weight with the NCHW-flatten permutation pre-folded
    # fb_ref  : (1, F_out)            FC bias
    # o_ref   : (TB, F_out)           softmax output block
    # conv_scr: VMEM (Ho*TB, Wo*Cout) conv map scratch (never written back to HBM)
    ho = fw_ref.shape[0]
    tb, _ = o_ref.shape

    # ---- conv(3x3, valid) + bias + ReLU as ONE matmul: (Ho*TB, 144) @ (144, Wo*Cout)
    xm = x_ref[0]                                                   # (Ho*TB, KH*W*Cin)
    conv = jnp.dot(xm, w3_ref[...], preferred_element_type=jnp.float32)
    conv_scr[...] = jnp.maximum(conv + cb_ref[...], 0.0)            # stays in VMEM

    # ---- Linear(Cout*Ho*Wo -> F_out): flatten permutation folded into fw_ref.
    #      feature[b] = fc_b + sum_y conv[y*TB + b, :] @ fw3[y]   (M = TB rows per dot)
    feat = jnp.dot(conv_scr[0:tb, :], fw_ref[0], preferred_element_type=jnp.float32)
    for y in range(1, ho):                                           # static unroll (Ho = 14)
        feat = feat + jnp.dot(conv_scr[y * tb:(y + 1) * tb, :], fw_ref[y],
                              preferred_element_type=jnp.float32)
    feat = feat + fb_ref[...]

    # ---- softmax over the F_out lanes (exact divide; kernel is not EUP/VALU bound)
    m = jnp.max(feat, axis=-1, keepdims=True)
    e = jnp.exp(feat - m)
    s = jnp.sum(e, axis=-1, keepdims=True)
    o_ref[...] = e / s


# ---------------- one-time weight preprocessing (hoisted out of the forward) ----------------

def prepare_convnet_params(conv_w, conv_b, fc_w, fc_b, *, H, W):
    """Builds the banded conv weight and permutation-folded FC weight (numpy, once)."""
    conv_w = np.asarray(conv_w, np.float32)        # (Cout, Cin, KH, KW)
    conv_b = np.asarray(conv_b, np.float32)        # (Cout,)
    fc_w = np.asarray(fc_w, np.float32)            # (F_out, Cout*Ho*Wo)
    fc_b = np.asarray(fc_b, np.float32)            # (F_out,)
    Cout, Cin, KH, KW = conv_w.shape
    Ho, Wo = H - KH + 1, W - KW + 1
    F_out = fc_w.shape[0]
    assert fc_w.shape[1] == Cout * Ho * Wo

    # Banded conv weight: w3[dy*W*Cin + w*Cin + ci, x*Cout + co] = conv_w[co, ci, dy, w-x]
    # for 0 <= w-x < KW (zero elsewhere).
    w3 = np.zeros((KH, W, Cin, Wo, Cout), np.float32)
    for dy in range(KH):
        for dx in range(KW):
            kslab = conv_w[:, :, dy, dx].T                            # (Cin, Cout)
            for xo in range(Wo):
                w3[dy, xo + dx, :, xo, :] = kslab
    w3 = w3.reshape(KH * W * Cin, Wo * Cout)

    conv_bias_row = np.tile(conv_b, Wo).reshape(1, Wo * Cout)

    # FC weight with the NCHW flatten permutation folded in:
    #   fw3[y, x*Cout+co, o] = fc_w[o, co*Ho*Wo + y*Wo + x]
    fw3 = (fc_w.reshape(F_out, Cout, Ho, Wo)
               .transpose(2, 3, 1, 0)
               .reshape(Ho, Wo * Cout, F_out))
    fc_bias_row = fc_b.reshape(1, F_out)

    return (jnp.asarray(w3), jnp.asarray(conv_bias_row),
            jnp.asarray(np.ascontiguousarray(fw3)), jnp.asarray(fc_bias_row))


# ---------------- forward pass ----------------

def convnet_forward(x, w3, conv_bias_row, fw3, fc_bias_row, *, tb=8):
    """x: (B, Cin, H, W) float32 (NCHW). Returns softmax features (B, F_out)."""
    B, Cin, H, W = x.shape
    Kh, n_conv = w3.shape
    Ho, n_conv2, F_out = fw3.shape
    assert n_conv2 == n_conv
    KH = H - Ho + 1
    assert Kh == KH * W * Cin
    assert tb % 8 == 0, "TB must be a multiple of 8 (sublane tile)"

    # -------- pad batch to a multiple of TB (padded rows sliced off after the kernel)
    nblk = -(-B // tb)
    B_pad = nblk * tb
    if B_pad != B:
        x = jnp.pad(x, ((0, B_pad - B), (0, 0), (0, 0), (0, 0)))

    # -------- layout glue on the (small) input: NCHW -> NHWC with (W, Cin) in lanes,
    #          then halo the KH kernel rows into lanes and regroup rows y-major within
    #          each TB batch block, so the in-kernel conv is a single 2-D matmul
    #          with no in-kernel reshape/relayout.
    x_hwc = jnp.transpose(x, (0, 2, 3, 1)).reshape(B_pad, H, W * Cin).astype(jnp.float32)
    x_halo = jnp.concatenate([x_hwc[:, dy:dy + Ho, :] for dy in range(KH)], axis=-1)
    # xg[g, y*tb + b_local, :] = x_halo[g*tb + b_local, y, :]
    xg = (x_halo.reshape(nblk, tb, Ho, Kh)
                .transpose(0, 2, 1, 3)
                .reshape(nblk, Ho * tb, Kh))

    out = pl.pallas_call(
        _convnet_fused_kernel,
        out_shape=jax.ShapeDtypeStruct((B_pad, F_out), jnp.float32),
        grid=(nblk,),
        in_specs=[
            # per-step halo'd input block
            pl.BlockSpec((1, Ho * tb, Kh), lambda i: (i, 0, 0)),
            # constant operands: single-buffered, fetched once
            pl.BlockSpec((Kh, n_conv), lambda i: (0, 0),
                         pipeline_mode=pl.Buffered(1)),
            pl.BlockSpec((1, n_conv), lambda i: (0, 0),
                         pipeline_mode=pl.Buffered(1)),
            pl.BlockSpec((Ho, n_conv, F_out), lambda i: (0, 0, 0),
                         pipeline_mode=pl.Buffered(1)),
            pl.BlockSpec((1, F_out), lambda i: (0, 0),
                         pipeline_mode=pl.Buffered(1)),
        ],
        out_specs=pl.BlockSpec((tb, F_out), lambda i: (i, 0)),
        scratch_shapes=[pltpu.VMEM((Ho * tb, n_conv), jnp.float32)],
        compiler_params=pltpu.CompilerParams(dimension_semantics=("parallel",)),
    )(xg, w3, conv_bias_row, fw3, fc_bias_row)

    return out[:B]


# ---------------- reference (pure JAX) for sanity check ----------------

def convnet_reference(x, conv_w, conv_b, fc_w, fc_b):
    conv = jax.lax.conv_general_dilated(
        x, conv_w, window_strides=(1, 1), padding="VALID",
        dimension_numbers=("NCHW", "OIHW", "NCHW"))
    conv = jnp.maximum(conv + conv_b[None, :, None, None], 0.0)
    vec = conv.reshape(conv.shape[0], -1)
    feat = vec @ fc_w.T + fc_b
    return jax.nn.softmax(feat, axis=1)


if __name__ == "__main__":
    Cin, H, W = 3, 16, 16
    Cout, KH, KW = 10, 3, 3
    Ho, Wo = H - KH + 1, W - KW + 1
    F_in, F_out = Cout * Ho * Wo, 20        # fc_block.in_features == 20

    key = jax.random.PRNGKey(0)
    k1, k2, k3, k4, k5 = jax.random.split(key, 5)
    conv_w = 0.10 * jax.random.normal(k2, (Cout, Cin, KH, KW), jnp.float32)
    conv_b = 0.10 * jax.random.normal(k3, (Cout,), jnp.float32)
    fc_w = 0.05 * jax.random.normal(k4, (F_out, F_in), jnp.float32)
    fc_b = 0.05 * jax.random.normal(k5, (F_out,), jnp.float32)

    # weight-side preprocessing done ONCE, outside the jitted forward (per perf review)
    params = prepare_convnet_params(conv_w, conv_b, fc_w, fc_b, H=H, W=W)
    fwd = jax.jit(convnet_forward)

    # main check: B=16 -> two grid steps of TB=8 (keeps >=2 steps for v7x 'parallel' split)
    x16 = jax.random.normal(k1, (16, Cin, H, W), jnp.float32)
    out16 = jax.block_until_ready(fwd(x16, *params))
    ref16 = convnet_reference(x16, conv_w, conv_b, fc_w, fc_b)
    assert out16.shape == (16, F_out)
    assert jnp.allclose(out16, ref16, atol=1e-4, rtol=1e-4), "mismatch vs reference (B=16)"
    assert jnp.allclose(jnp.sum(out16, axis=1), 1.0, atol=1e-5)

    # ragged-batch check: B=2 (padded to one TB=8 block; padded rows sliced off)
    x2 = x16[:2]
    out2 = jax.block_until_ready(fwd(x2, *params))
    ref2 = convnet_reference(x2, conv_w, conv_b, fc_w, fc_b)
    assert out2.shape == (2, F_out)
    assert jnp.allclose(out2, ref2, atol=1e-4, rtol=1e-4), "mismatch vs reference (B=2)"

    print("KERNEL_OK")
</pallas_src>

<mosaic_0001>
module attributes {stable_mosaic.version = 11 : i64} {
  func.func @_convnet_fused_kernel(%arg0: i32, %arg1: memref<1x112x144xf32, #tpu.memory_space<vmem>>, %arg2: memref<144x140xf32, #tpu.memory_space<vmem>>, %arg3: memref<1x140xf32, #tpu.memory_space<vmem>>, %arg4: memref<14x140x20xf32, #tpu.memory_space<vmem>>, %arg5: memref<1x20xf32, #tpu.memory_space<vmem>>, %arg6: memref<8x20xf32, #tpu.memory_space<vmem>>, %arg7: memref<112x140xf32, #tpu.memory_space<vmem>>) attributes {dimension_semantics = [#tpu.dimension_semantics<parallel>], iteration_bounds = array<i64: 2>, scalar_prefetch = 0 : i64, scratch_operands = 1 : i64, tpu.core_type = #tpu.core_type<tc>, window_params = [{transform_indices = @transform_0, window_bounds = array<i64: 1, 112, 144>}, {pipeline_mode = #tpu.pipeline_mode<synchronous>, transform_indices = @transform_1, window_bounds = array<i64: 144, 140>}, {pipeline_mode = #tpu.pipeline_mode<synchronous>, transform_indices = @transform_2, window_bounds = array<i64: 1, 140>}, {pipeline_mode = #tpu.pipeline_mode<synchronous>, transform_indices = @transform_3, window_bounds = array<i64: 14, 140, 20>}, {pipeline_mode = #tpu.pipeline_mode<synchronous>, transform_indices = @transform_4, window_bounds = array<i64: 1, 20>}, {transform_indices = @transform_5, window_bounds = array<i64: 8, 20>}]} {
    %c0 = arith.constant 0 : index
    %c0_0 = arith.constant 0 : index
    %c0_1 = arith.constant 0 : index
    %0 = vector.load %arg1[%c0, %c0_0, %c0_1] : memref<1x112x144xf32, #tpu.memory_space<vmem>>, vector<1x112x144xf32>
    %1 = vector.shape_cast %0 : vector<1x112x144xf32> to vector<112x144xf32>
    %c0_2 = arith.constant 0 : index
    %c0_3 = arith.constant 0 : index
    %2 = vector.load %arg2[%c0_2, %c0_3] : memref<144x140xf32, #tpu.memory_space<vmem>>, vector<144x140xf32>
    %cst = arith.constant dense<0.000000e+00> : vector<112x140xf32>
    %3 = tpu.matmul %1, %2, %cst {dimension_numbers = #tpu.dot_dimension_numbers<[1], [0], [0], [1], [0, 0, 1, 1], [], []>} : vector<112x144xf32>, vector<144x140xf32>, vector<112x140xf32> -> vector<112x140xf32>
    %c0_4 = arith.constant 0 : index
    %c0_5 = arith.constant 0 : index
    %4 = vector.load %arg3[%c0_4, %c0_5] : memref<1x140xf32, #tpu.memory_space<vmem>>, vector<1x140xf32>
    %5 = vector.broadcast %4 : vector<1x140xf32> to vector<112x140xf32>
    %6 = arith.addf %3, %5 : vector<112x140xf32>
    %cst_6 = arith.constant 0.000000e+00 : f32
    %7 = vector.broadcast %cst_6 : f32 to vector<112x140xf32>
    %8 = arith.maximumf %6, %7 : vector<112x140xf32>
    %c0_7 = arith.constant 0 : index
    %c0_8 = arith.constant 0 : index
    %9 = vector.load %arg7[%c0_7, %c0_8] : memref<112x140xf32, #tpu.memory_space<vmem>>, vector<112x140xf32>
    tpu.vector_store %arg7[%c0_7, %c0_8], %8 {strides = array<i32>} : memref<112x140xf32, #tpu.memory_space<vmem>>, vector<112x140xf32>,
    %c0_9 = arith.constant 0 : index
    %c0_10 = arith.constant 0 : index
    %10 = vector.load %arg7[%c0_9, %c0_10] : memref<112x140xf32, #tpu.memory_space<vmem>>, vector<8x140xf32>
    %c0_11 = arith.constant 0 : index
    %c0_12 = arith.constant 0 : index
    %c0_13 = arith.constant 0 : index
    %11 = vector.load %arg4[%c0_11, %c0_12, %c0_13] : memref<14x140x20xf32, #tpu.memory_space<vmem>>, vector<1x140x20xf32>
    %12 = vector.shape_cast %11 : vector<1x140x20xf32> to vector<140x20xf32>
    %cst_14 = arith.constant dense<0.000000e+00> : vector<8x20xf32>
    %13 = tpu.matmul %10, %12, %cst_14 {dimension_numbers = #tpu.dot_dimension_numbers<[1], [0], [0], [1], [0, 0, 1, 1], [], []>} : vector<8x140xf32>, vector<140x20xf32>, vector<8x20xf32> -> vector<8x20xf32>
    %c8 = arith.constant 8 : index
    %c0_15 = arith.constant 0 : index
    %14 = vector.load %arg7[%c8, %c0_15] : memref<112x140xf32, #tpu.memory_space<vmem>>, vector<8x140xf32>
    %c1 = arith.constant 1 : index
    %c0_16 = arith.constant 0 : index
    %c0_17 = arith.constant 0 : index
    %15 = vector.load %arg4[%c1, %c0_16, %c0_17] : memref<14x140x20xf32, #tpu.memory_space<vmem>>, vector<1x140x20xf32>
    %16 = vector.shape_cast %15 : vector<1x140x20xf32> to vector<140x20xf32>
    %cst_18 = arith.constant dense<0.000000e+00> : vector<8x20xf32>
    %17 = tpu.matmul %14, %16, %cst_18 {dimension_numbers = #tpu.dot_dimension_numbers<[1], [0], [0], [1], [0, 0, 1, 1], [], []>} : vector<8x140xf32>, vector<140x20xf32>, vector<8x20xf32> -> vector<8x20xf32>
    %18 = arith.addf %13, %17 : vector<8x20xf32>
    %c16 = arith.constant 16 : index
    %c0_19 = arith.constant 0 : index
    %19 = vector.load %arg7[%c16, %c0_19] : memref<112x140xf32, #tpu.memory_space<vmem>>, vector<8x140xf32>
    %c2 = arith.constant 2 : index
    %c0_20 = arith.constant 0 : index
    %c0_21 = arith.constant 0 : index
    %20 = vector.load %arg4[%c2, %c0_20, %c0_21] : memref<14x140x20xf32, #tpu.memory_space<vmem>>, vector<1x140x20xf32>
    %21 = vector.shape_cast %20 : vector<1x140x20xf32> to vector<140x20xf32>
    %cst_22 = arith.constant dense<0.000000e+00> : vector<8x20xf32>
    %22 = tpu.matmul %19, %21, %cst_22 {dimension_numbers = #tpu.dot_dimension_numbers<[1], [0], [0], [1], [0, 0, 1, 1], [], []>} : vector<8x140xf32>, vector<140x20xf32>, vector<8x20xf32> -> vector<8x20xf32>
    %23 = arith.addf %18, %22 : vector<8x20xf32>
    %c24 = arith.constant 24 : index
    %c0_23 = arith.constant 0 : index
    %24 = vector.load %arg7[%c24, %c0_23] : memref<112x140xf32, #tpu.memory_space<vmem>>, vector<8x140xf32>
    %c3 = arith.constant 3 : index
    %c0_24 = arith.constant 0 : index
    %c0_25 = arith.constant 0 : index
    %25 = vector.load %arg4[%c3, %c0_24, %c0_25] : memref<14x140x20xf32, #tpu.memory_space<vmem>>, vector<1x140x20xf32>
    %26 = vector.shape_cast %25 : vector<1x140x20xf32> to vector<140x20xf32>
    %cst_26 = arith.constant dense<0.000000e+00> : vector<8x20xf32>
    %27 = tpu.matmul %24, %26, %cst_26 {dimension_numbers = #tpu.dot_dimension_numbers<[1], [0], [0], [1], [0, 0, 1, 1], [], []>} : vector<8x140xf32>, vector<140x20xf32>, vector<8x20xf32> -> vector<8x20xf32>
    %28 = arith.addf %23, %27 : vector<8x20xf32>
    %c32 = arith.constant 32 : index
    %c0_27 = arith.constant 0 : index
    %29 = vector.load %arg7[%c32, %c0_27] : memref<112x140xf32, #tpu.memory_space<vmem>>, vector<8x140xf32>
    %c4 = arith.constant 4 : index
    %c0_28 = arith.constant 0 : index
    %c0_29 = arith.constant 0 : index
    %30 = vector.load %arg4[%c4, %c0_28, %c0_29] : memref<14x140x20xf32, #tpu.memory_space<vmem>>, vector<1x140x20xf32>
    %31 = vector.shape_cast %30 : vector<1x140x20xf32> to vector<140x20xf32>
    %cst_30 = arith.constant dense<0.000000e+00> : vector<8x20xf32>
    %32 = tpu.matmul %29, %31, %cst_30 {dimension_numbers = #tpu.dot_dimension_numbers<[1], [0], [0], [1], [0, 0, 1, 1], [], []>} : vector<8x140xf32>, vector<140x20xf32>, vector<8x20xf32> -> vector<8x20xf32>
    %33 = arith.addf %28, %32 : vector<8x20xf32>
    %c40 = arith.constant 40 : index
    %c0_31 = arith.constant 0 : index
    %34 = vector.load %arg7[%c40, %c0_31] : memref<112x140xf32, #tpu.memory_space<vmem>>, vector<8x140xf32>
    %c5 = arith.constant 5 : index
    %c0_32 = arith.constant 0 : index
    %c0_33 = arith.constant 0 : index
    %35 = vector.load %arg4[%c5, %c0_32, %c0_33] : memref<14x140x20xf32, #tpu.memory_space<vmem>>, vector<1x140x20xf32>
    %36 = vector.shape_cast %35 : vector<1x140x20xf32> to vector<140x20xf32>
    %cst_34 = arith.constant dense<0.000000e+00> : vector<8x20xf32>
    %37 = tpu.matmul %34, %36, %cst_34 {dimension_numbers = #tpu.dot_dimension_numbers<[1], [0], [0], [1], [0, 0, 1, 1], [], []>} : vector<8x140xf32>, vector<140x20xf32>, vector<8x20xf32> -> vector<8x20xf32>
    %38 = arith.addf %33, %37 : vector<8x20xf32>
    %c48 = arith.constant 48 : index
    %c0_35 = arith.constant 0 : index
    %39 = vector.load %arg7[%c48, %c0_35] : memref<112x140xf32, #tpu.memory_space<vmem>>, vector<8x140xf32>
    %c6 = arith.constant 6 : index
    %c0_36 = arith.constant 0 : index
    %c0_37 = arith.constant 0 : index
    %40 = vector.load %arg4[%c6, %c0_36, %c0_37] : memref<14x140x20xf32, #tpu.memory_space<vmem>>, vector<1x140x20xf32>
    %41 = vector.shape_cast %40 : vector<1x140x20xf32> to vector<140x20xf32>
    %cst_38 = arith.constant dense<0.000000e+00> : vector<8x20xf32>
    %42 = tpu.matmul %39, %41, %cst_38 {dimension_numbers = #tpu.dot_dimension_numbers<[1], [0], [0], [1], [0, 0, 1, 1], [], []>} : vector<8x140xf32>, vector<140x20xf32>, vector<8x20xf32> -> vector<8x20xf32>
    %43 = arith.addf %38, %42 : vector<8x20xf32>
    %c56 = arith.constant 56 : index
    %c0_39 = arith.constant 0 : index
    %44 = vector.load %arg7[%c56, %c0_39] : memref<112x140xf32, #tpu.memory_space<vmem>>, vector<8x140xf32>
    %c7 = arith.constant 7 : index
    %c0_40 = arith.constant 0 : index
    %c0_41 = arith.constant 0 : index
    %45 = vector.load %arg4[%c7, %c0_40, %c0_41] : memref<14x140x20xf32, #tpu.memory_space<vmem>>, vector<1x140x20xf32>
    %46 = vector.shape_cast %45 : vector<1x140x20xf32> to vector<140x20xf32>
    %cst_42 = arith.constant dense<0.000000e+00> : vector<8x20xf32>
    %47 = tpu.matmul %44, %46, %cst_42 {dimension_numbers = #tpu.dot_dimension_numbers<[1], [0], [0], [1], [0, 0, 1, 1], [], []>} : vector<8x140xf32>, vector<140x20xf32>, vector<8x20xf32> -> vector<8x20xf32>
    %48 = arith.addf %43, %47 : vector<8x20xf32>
    %c64 = arith.constant 64 : index
    %c0_43 = arith.constant 0 : index
    %49 = vector.load %arg7[%c64, %c0_43] : memref<112x140xf32, #tpu.memory_space<vmem>>, vector<8x140xf32>
    %c8_44 = arith.constant 8 : index
    %c0_45 = arith.constant 0 : index
    %c0_46 = arith.constant 0 : index
    %50 = vector.load %arg4[%c8_44, %c0_45, %c0_46] : memref<14x140x20xf32, #tpu.memory_space<vmem>>, vector<1x140x20xf32>
    %51 = vector.shape_cast %50 : vector<1x140x20xf32> to vector<140x20xf32>
    %cst_47 = arith.constant dense<0.000000e+00> : vector<8x20xf32>
    %52 = tpu.matmul %49, %51, %cst_47 {dimension_numbers = #tpu.dot_dimension_numbers<[1], [0], [0], [1], [0, 0, 1, 1], [], []>} : vector<8x140xf32>, vector<140x20xf32>, vector<8x20xf32> -> vector<8x20xf32>
    %53 = arith.addf %48, %52 : vector<8x20xf32>
    %c72 = arith.constant 72 : index
    %c0_48 = arith.constant 0 : index
    %54 = vector.load %arg7[%c72, %c0_48] : memref<112x140xf32, #tpu.memory_space<vmem>>, vector<8x140xf32>
    %c9 = arith.constant 9 : index
    %c0_49 = arith.constant 0 : index
    %c0_50 = arith.constant 0 : index
    %55 = vector.load %arg4[%c9, %c0_49, %c0_50] : memref<14x140x20xf32, #tpu.memory_space<vmem>>, vector<1x140x20xf32>
    %56 = vector.shape_cast %55 : vector<1x140x20xf32> to vector<140x20xf32>
    %cst_51 = arith.constant dense<0.000000e+00> : vector<8x20xf32>
    %57 = tpu.matmul %54, %56, %cst_51 {dimension_numbers = #tpu.dot_dimension_numbers<[1], [0], [0], [1], [0, 0, 1, 1], [], []>} : vector<8x140xf32>, vector<140x20xf32>, vector<8x20xf32> -> vector<8x20xf32>
    %58 = arith.addf %53, %57 : vector<8x20xf32>
    %c80 = arith.constant 80 : index
    %c0_52 = arith.constant 0 : index
    %59 = vector.load %arg7[%c80, %c0_52] : memref<112x140xf32, #tpu.memory_space<vmem>>, vector<8x140xf32>
    %c10 = arith.constant 10 : index
    %c0_53 = arith.constant 0 : index
    %c0_54 = arith.constant 0 : index
    %60 = vector.load %arg4[%c10, %c0_53, %c0_54] : memref<14x140x20xf32, #tpu.memory_space<vmem>>, vector<1x140x20xf32>
    %61 = vector.shape_cast %60 : vector<1x140x20xf32> to vector<140x20xf32>
    %cst_55 = arith.constant dense<0.000000e+00> : vector<8x20xf32>
    %62 = tpu.matmul %59, %61, %cst_55 {dimension_numbers = #tpu.dot_dimension_numbers<[1], [0], [0], [1], [0, 0, 1, 1], [], []>} : vector<8x140xf32>, vector<140x20xf32>, vector<8x20xf32> -> vector<8x20xf32>
    %63 = arith.addf %58, %62 : vector<8x20xf32>
    %c88 = arith.constant 88 : index
    %c0_56 = arith.constant 0 : index
    %64 = vector.load %arg7[%c88, %c0_56] : memref<112x140xf32, #tpu.memory_space<vmem>>, vector<8x140xf32>
    %c11 = arith.constant 11 : index
    %c0_57 = arith.constant 0 : index
    %c0_58 = arith.constant 0 : index
    %65 = vector.load %arg4[%c11, %c0_57, %c0_58] : memref<14x140x20xf32, #tpu.memory_space<vmem>>, vector<1x140x20xf32>
    %66 = vector.shape_cast %65 : vector<1x140x20xf32> to vector<140x20xf32>
    %cst_59 = arith.constant dense<0.000000e+00> : vector<8x20xf32>
    %67 = tpu.matmul %64, %66, %cst_59 {dimension_numbers = #tpu.dot_dimension_numbers<[1], [0], [0], [1], [0, 0, 1, 1], [], []>} : vector<8x140xf32>, vector<140x20xf32>, vector<8x20xf32> -> vector<8x20xf32>
    %68 = arith.addf %63, %67 : vector<8x20xf32>
    %c96 = arith.constant 96 : index
    %c0_60 = arith.constant 0 : index
    %69 = vector.load %arg7[%c96, %c0_60] : memref<112x140xf32, #tpu.memory_space<vmem>>, vector<8x140xf32>
    %c12 = arith.constant 12 : index
    %c0_61 = arith.constant 0 : index
    %c0_62 = arith.constant 0 : index
    %70 = vector.load %arg4[%c12, %c0_61, %c0_62] : memref<14x140x20xf32, #tpu.memory_space<vmem>>, vector<1x140x20xf32>
    %71 = vector.shape_cast %70 : vector<1x140x20xf32> to vector<140x20xf32>
    %cst_63 = arith.constant dense<0.000000e+00> : vector<8x20xf32>
    %72 = tpu.matmul %69, %71, %cst_63 {dimension_numbers = #tpu.dot_dimension_numbers<[1], [0], [0], [1], [0, 0, 1, 1], [], []>} : vector<8x140xf32>, vector<140x20xf32>, vector<8x20xf32> -> vector<8x20xf32>
    %73 = arith.addf %68, %72 : vector<8x20xf32>
    %c104 = arith.constant 104 : index
    %c0_64 = arith.constant 0 : index
    %74 = vector.load %arg7[%c104, %c0_64] : memref<112x140xf32, #tpu.memory_space<vmem>>, vector<8x140xf32>
    %c13 = arith.constant 13 : index
    %c0_65 = arith.constant 0 : index
    %c0_66 = arith.constant 0 : index
    %75 = vector.load %arg4[%c13, %c0_65, %c0_66] : memref<14x140x20xf32, #tpu.memory_space<vmem>>, vector<1x140x20xf32>
    %76 = vector.shape_cast %75 : vector<1x140x20xf32> to vector<140x20xf32>
    %cst_67 = arith.constant dense<0.000000e+00> : vector<8x20xf32>
    %77 = tpu.matmul %74, %76, %cst_67 {dimension_numbers = #tpu.dot_dimension_numbers<[1], [0], [0], [1], [0, 0, 1, 1], [], []>} : vector<8x140xf32>, vector<140x20xf32>, vector<8x20xf32> -> vector<8x20xf32>
    %78 = arith.addf %73, %77 : vector<8x20xf32>
    %c0_68 = arith.constant 0 : index
    %c0_69 = arith.constant 0 : index
    %79 = vector.load %arg5[%c0_68, %c0_69] : memref<1x20xf32, #tpu.memory_space<vmem>>, vector<1x20xf32>
    %80 = vector.broadcast %79 : vector<1x20xf32> to vector<8x20xf32>
    %81 = arith.addf %78, %80 : vector<8x20xf32>
    %cst_70 = arith.constant dense<0xFF800000> : vector<8xf32>
    %82 = vector.multi_reduction <maximumf>, %81, %cst_70 [1] : vector<8x20xf32> to vector<8xf32>
    %83 = vector.shape_cast %82 : vector<8xf32> to vector<8x1xf32>
    %84 = vector.broadcast %83 : vector<8x1xf32> to vector<8x20xf32>
    %85 = arith.subf %81, %84 : vector<8x20xf32>
    %86 = math.exp %85 : vector<8x20xf32>
    %cst_71 = arith.constant dense<0.000000e+00> : vector<8xf32>
    %87 = vector.multi_reduction <add>, %86, %cst_71 [1] : vector<8x20xf32> to vector<8xf32>
    %88 = vector.shape_cast %87 : vector<8xf32> to vector<8x1xf32>
    %89 = vector.broadcast %88 : vector<8x1xf32> to vector<8x20xf32>
    %90 = arith.divf %86, %89 : vector<8x20xf32>
    %c0_72 = arith.constant 0 : index
    %c0_73 = arith.constant 0 : index
    %91 = vector.load %arg6[%c0_72, %c0_73] : memref<8x20xf32, #tpu.memory_space<vmem>>, vector<8x20xf32>
    tpu.vector_store %arg6[%c0_72, %c0_73], %90 {strides = array<i32>} : memref<8x20xf32, #tpu.memory_space<vmem>>, vector<8x20xf32>,
    return
  }
  func.func @transform_0(%arg0: i32) -> (i32, i32, i32) {
    %c0_i32 = arith.constant 0 : i32
    %c0_i32_0 = arith.constant 0 : i32
    %c0_i32_1 = arith.constant 0 : i32
    return %arg0, %c0_i32, %c0_i32_0 : i32, i32, i32
  }
  func.func @transform_1(%arg0: i32) -> (i32, i32) {
    %c0_i32 = arith.constant 0 : i32
    %c0_i32_0 = arith.constant 0 : i32
    %c0_i32_1 = arith.constant 0 : i32
    return %c0_i32, %c0_i32_0 : i32, i32
  }
  func.func @transform_2(%arg0: i32) -> (i32, i32) {
    %c0_i32 = arith.constant 0 : i32
    %c0_i32_0 = arith.constant 0 : i32
    %c0_i32_1 = arith.constant 0 : i32
    return %c0_i32, %c0_i32_0 : i32, i32
  }
  func.func @transform_3(%arg0: i32) -> (i32, i32, i32) {
    %c0_i32 = arith.constant 0 : i32
    %c0_i32_0 = arith.constant 0 : i32
    %c0_i32_1 = arith.constant 0 : i32
    %c0_i32_2 = arith.constant 0 : i32
    return %c0_i32, %c0_i32_0, %c0_i32_1 : i32, i32, i32
  }
  func.func @transform_4(%arg0: i32) -> (i32, i32) {
    %c0_i32 = arith.constant 0 : i32
    %c0_i32_0 = arith.constant 0 : i32
    %c0_i32_1 = arith.constant 0 : i32
    return %c0_i32, %c0_i32_0 : i32, i32
  }
  func.func @transform_5(%arg0: i32) -> (i32, i32) {
    %c0_i32 = arith.constant 0 : i32
    %c0_i32_0 = arith.constant 0 : i32
    return %arg0, %c0_i32 : i32, i32
  }
}

</mosaic_0001>

<llo_original>
// kernel: convnet_forward.1
$region0: #{convnet_forward.1}
  #allocation0 [shape = 'u32[]', space=smem, size = 0x4, offset = 0x4, fixed_abs, tag = 'smem constant byte address 0x4 - core index']
  #allocation1 [shape = 'u32[144,128]{1,0:T(1,128)}', space=vmem, size = 0x12000, scoped, tag = 'internal scratch']
  #allocation2 [shape = 'f32[112,140]{1,0:T(8,128)}', space=vmem, size = 0x1c000, scoped, tag = 'scratch operand']
  %s0 = inlined_call_operand.vmem [shape: f32[2,112,144], index: 0, kind: input, shape index: {}]
  %s1 = inlined_call_operand.vmem [shape: f32[144,140], index: 1, kind: input, shape index: {}]
  %s2 = inlined_call_operand.vmem [shape: f32[1,140], index: 2, kind: input, shape index: {}]
  %s3 = inlined_call_operand.vmem [shape: f32[14,140,20], index: 3, kind: input, shape index: {}]
  %s4 = inlined_call_operand.vmem [shape: f32[1,20], index: 4, kind: input, shape index: {}]
  %s5 = inlined_call_operand.hbm [shape: f32[16,20], index: 5, kind: output, shape index: {}]
  %s6 = sld [smem:[#allocation0]]
  $region53: #{convnet_forward.1} parent=0
    _
  %s8 = ssub.s32 1, %s6
  %s9 = scalar_select 0, %s8, %s6
  $region1: #{convnet_forward.1} parent=0
    #allocation3 [shape = 'u8[8192]{0}', space=vmem, size = 0x2000, scoped, tag = 'output window, operand 0']
    #allocation4 [shape = 's32[2]{0}', space=sflag, size = 0x8, scoped, tag = 'scoped memory for convnet_forward.1']
    %10 = vsyncpa [#allocation4], 0
    %s11 = scalar_lea.sflag [#allocation4], 1
    %12 = vsyncpa %s11, 0
    loop: start=0, step=1, limit=4
    $region2: #{convnet_forward.1} parent=1 // loop_pre_header
      _
    $region3: #{convnet_forward.1} parent=1 // loop_header
      %s14 = sphi 0, %s18
      %p15 = scmp.ge.s32.totalorder %s14, 4
      %s24 = sphi 0, %s26
      %s27 = sphi 0, %s24
      %s28 = sphi 0, %s27
      %s44 = sphi 0, %s28
      %s48 = sphi 0, %s48
      %s50 = sphi 0, %s48
      %s51 = sphi 0, %s50
      %s65 = sphi 0, %s51
      %s69 = sphi 0, %s69
      %s71 = sphi 0, %s69
      %s72 = sphi 0, %s71
      %s86 = sphi 0, %s72
      %s90 = sphi 0, %s90
      %s92 = sphi 0, %s90
      %s93 = sphi 0, %s92
      %s107 = sphi 0, %s93
      %s111 = sphi 0, %s111
      %s113 = sphi 0, %s111
      %s114 = sphi 0, %s113
      %s128 = sphi 0, %s114
      %s134 = sphi 0, %s136
      %s137 = sphi 0, %s134
      %s138 = sphi 0, %s137
      %s154 = sphi 0, %s138
    $region4: #{convnet_forward.1} parent=1 // loop_header_branch
      %17 = sbr.rel (%p15) target = $region8
    $region5: #{convnet_forward.1} parent=1 // loop_body
      %s19 = ssub.s32 %s14, 1
      %s20 = ssub.s32 %s14, 2
      %s21 = sadd.s32 %s14, 1
      %s22 = ssub.s32 %s14, %s21
      %p23 = scmp.eq.s32.totalorder %s22, 0
      %s25 = sadd.s32 %s24, 1
      %s26 = scalar_select %p23, %s24, %s25
      %p29 = pneg %p23
      %p30 = scmp.eq.s32.totalorder %s14, 1
      %p31 = por %p29, %p30
      %p32 = scmp.ne.s32.totalorder %s24, %s27
      %p33 = scmp.eq.s32.totalorder %s14, 0
      %p34 = por %p32, %p33
      %p35 = scmp.ne.s32.totalorder %s24, %s27
      %p36 = scmp.eq.s32.totalorder %s19, 1
      %p37 = por %p35, %p36
      %p38 = scmp.ne.s32.totalorder %s27, %s28
      %p39 = scmp.eq.s32.totalorder %s19, 0
      %p40 = por %p38, %p39
      %p41 = scmp.ne.s32.totalorder %s27, %s28
      %p42 = scmp.eq.s32.totalorder %s20, 1
      %p43 = por %p41, %p42
      %p45 = scmp.ne.s32.totalorder %s28, %s44
      %p46 = scmp.eq.s32.totalorder %s20, 0
      %p47 = por %p45, %p46
      %s49 = sadd.s32 %s48, 1
      %p52 = scmp.eq.s32.totalorder %s14, 1
      %p53 = scmp.ne.s32.totalorder %s48, %s50
      %p54 = scmp.eq.s32.totalorder %s14, 0
      %p55 = por %p53, %p54
      %p56 = scmp.ne.s32.totalorder %s48, %s50
      %p57 = scmp.eq.s32.totalorder %s19, 1
      %p58 = por %p56, %p57
      %p59 = scmp.ne.s32.totalorder %s50, %s51
      %p60 = scmp.eq.s32.totalorder %s19, 0
      %p61 = por %p59, %p60
      %p62 = scmp.ne.s32.totalorder %s50, %s51
      %p63 = scmp.eq.s32.totalorder %s20, 1
      %p64 = por %p62, %p63
      %p66 = scmp.ne.s32.totalorder %s51, %s65
      %p67 = scmp.eq.s32.totalorder %s20, 0
      %p68 = por %p66, %p67
      %s70 = sadd.s32 %s69, 1
      %p73 = scmp.eq.s32.totalorder %s14, 1
      %p74 = scmp.ne.s32.totalorder %s69, %s71
      %p75 = scmp.eq.s32.totalorder %s14, 0
      %p76 = por %p74, %p75
      %p77 = scmp.ne.s32.totalorder %s69, %s71
      %p78 = scmp.eq.s32.totalorder %s19, 1
      %p79 = por %p77, %p78
      %p80 = scmp.ne.s32.totalorder %s71, %s72
      %p81 = scmp.eq.s32.totalorder %s19, 0
      %p82 = por %p80, %p81
      %p83 = scmp.ne.s32.totalorder %s71, %s72
      %p84 = scmp.eq.s32.totalorder %s20, 1
      %p85 = por %p83, %p84
      %p87 = scmp.ne.s32.totalorder %s72, %s86
      %p88 = scmp.eq.s32.totalorder %s20, 0
      %p89 = por %p87, %p88
      %s91 = sadd.s32 %s90, 1
      %p94 = scmp.eq.s32.totalorder %s14, 1
      %p95 = scmp.ne.s32.totalorder %s90, %s92
      %p96 = scmp.eq.s32.totalorder %s14, 0
      %p97 = por %p95, %p96
      %p98 = scmp.ne.s32.totalorder %s90, %s92
      %p99 = scmp.eq.s32.totalorder %s19, 1
      %p100 = por %p98, %p99
      %p101 = scmp.ne.s32.totalorder %s92, %s93
      %p102 = scmp.eq.s32.totalorder %s19, 0
      %p103 = por %p101, %p102
      %p104 = scmp.ne.s32.totalorder %s92, %s93
      %p105 = scmp.eq.s32.totalorder %s20, 1
      %p106 = por %p104, %p105
      %p108 = scmp.ne.s32.totalorder %s93, %s107
      %p109 = scmp.eq.s32.totalorder %s20, 0
      %p110 = por %p108, %p109
      %s112 = sadd.s32 %s111, 1
      %p115 = scmp.eq.s32.totalorder %s14, 1
      %p116 = scmp.ne.s32.totalorder %s111, %s113
      %p117 = scmp.eq.s32.totalorder %s14, 0
      %p118 = por %p116, %p117
      %p119 = scmp.ne.s32.totalorder %s111, %s113
      %p120 = scmp.eq.s32.totalorder %s19, 1
      %p121 = por %p119, %p120
      %p122 = scmp.ne.s32.totalorder %s113, %s114
      %p123 = scmp.eq.s32.totalorder %s19, 0
      %p124 = por %p122, %p123
      %p125 = scmp.ne.s32.totalorder %s113, %s114
      %p126 = scmp.eq.s32.totalorder %s20, 1
      %p127 = por %p125, %p126
      %p129 = scmp.ne.s32.totalorder %s114, %s128
      %p130 = scmp.eq.s32.totalorder %s20, 0
      %p131 = por %p129, %p130
      %s132 = ssub.s32 %s14, %s21
      %p133 = scmp.eq.s32.totalorder %s132, 0
      %s135 = sadd.s32 %s134, 1
      %s136 = scalar_select %p133, %s134, %s135
      %p139 = pneg %p133
      %p140 = scmp.eq.s32.totalorder %s14, 1
      %p141 = por %p139, %p140
      %p142 = scmp.ne.s32.totalorder %s134, %s137
      %p143 = scmp.eq.s32.totalorder %s14, 0
      %p144 = por %p142, %p143
      %p145 = scmp.ne.s32.totalorder %s134, %s137
      %p146 = scmp.eq.s32.totalorder %s19, 1
      %p147 = por %p145, %p146
      %p148 = scmp.ne.s32.totalorder %s137, %s138
      %p149 = scmp.eq.s32.totalorder %s19, 0
      %p150 = por %p148, %p149
      %p151 = scmp.ne.s32.totalorder %s137, %s138
      %p152 = scmp.eq.s32.totalorder %s20, 1
      %p153 = por %p151, %p152
      %p155 = scmp.ne.s32.totalorder %s138, %s154
      %p156 = scmp.eq.s32.totalorder %s20, 0
      %p157 = por %p155, %p156
      %p158 = scmp.le.s32.totalorder 1, %s14
      %p159 = scmp.lt.s32.totalorder %s14, 3
      %p160 = pnand %p158, %p159
      %p161 = pneg %p160
      // Predicated region
      $region9: #{convnet_forward.1} parent=5 // pred_check
        _
      $region10: #{convnet_forward.1} parent=5 // pred_check_branch
        %163 = sbr.rel (%p160) target = $region12
      $region11: #{convnet_forward.1} parent=5 // pred_region
        %s164 = ssub.s32 %s14, 1
        // Predicated region
        $region13: #{convnet_forward.1} parent=11 // pred_check
          %p165 = pneg %p61
        $region14: #{convnet_forward.1} parent=11 // pred_check_branch
          %167 = sbr.rel (%p165) target = $region16
        $region15: #{convnet_forward.1} parent=11 // pred_region
          _
        $region16: #{convnet_forward.1} parent=11 // pred_fallthru
          _
        // Predicated region
        $region17: #{convnet_forward.1} parent=11 // pred_check
          %p168 = pneg %p82
        $region18: #{convnet_forward.1} parent=11 // pred_check_branch
          %170 = sbr.rel (%p168) target = $region20
        $region19: #{convnet_forward.1} parent=11 // pred_region
          _
        $region20: #{convnet_forward.1} parent=11 // pred_fallthru
          _
        // Predicated region
        $region21: #{convnet_forward.1} parent=11 // pred_check
          %p171 = pneg %p103
        $region22: #{convnet_forward.1} parent=11 // pred_check_branch
          %173 = sbr.rel (%p171) target = $region24
        $region23: #{convnet_forward.1} parent=11 // pred_region
          _
        $region24: #{convnet_forward.1} parent=11 // pred_fallthru
          _
        // Predicated region
        $region25: #{convnet_forward.1} parent=11 // pred_check
          %p174 = pneg %p124
        $region26: #{convnet_forward.1} parent=11 // pred_check_branch
          %176 = sbr.rel (%p174) target = $region28
        $region27: #{convnet_forward.1} parent=11 // pred_region
          _
        $region28: #{convnet_forward.1} parent=11 // pred_fallthru
          _
      $region12: #{convnet_forward.1} parent=5 // pred_fallthru
        _
      %p177 = scmp.lt.s32.totalorder %s14, 2
      // Predicated region
      $region29: #{convnet_forward.1} parent=5 // pred_check
        %p178 = pneg %p177
      $region30: #{convnet_forward.1} parent=5 // pred_check_branch
        %180 = sbr.rel (%p178) target = $region32
      $region31: #{convnet_forward.1} parent=5 // pred_region
        // Predicated region
        $region33: #{convnet_forward.1} parent=31 // pred_check
          %p181 = pneg %p34
        $region34: #{convnet_forward.1} parent=31 // pred_check_branch
          %183 = sbr.rel (%p181) target = $region36
        $region35: #{convnet_forward.1} parent=31 // pred_region
          %p184 = scmp.lt.s32.totalorder %s14, 1
          %s185 = scalar_select %p184, %s14, 1
          %s186 = smul.addr %s185, 28
          %s187 = smul.addr %s186, 8
          %s188 = scalar_lea.vmem %s0, %s187
        $region36: #{convnet_forward.1} parent=31 // pred_fallthru
          _
      $region32: #{convnet_forward.1} parent=5 // pred_fallthru
        _
      %p189 = scmp.le.s32.totalorder 1, %s14
      %p190 = scmp.lt.s32.totalorder %s14, 3
      %p191 = pnand %p189, %p190
      %p192 = pneg %p191
      // Predicated region
      $region37: #{convnet_forward.1} parent=5 // pred_check
        _
      $region38: #{convnet_forward.1} parent=5 // pred_check_branch
        %194 = sbr.rel (%p191) target = $region40
      $region39: #{convnet_forward.1} parent=5 // pred_region
        %s195 = ssub.s32 %s14, 1
        %p196 = scmp.lt.s32.totalorder %s19, 1
        %s197 = scalar_select %p196, %s19, 1
        %s198 = smul.addr %s197, 28
        %s199 = smul.addr %s198, 8
        %s200 = scalar_lea.vmem %s0, %s199
        %p201 = pneg %p40
        %p202 = pneg %p37
        %p203 = pneg %p61
        %p204 = pneg %p58
        %p205 = pneg %p82
        %p206 = pneg %p79
        %p207 = pneg %p103
        %p208 = pneg %p100
        %p209 = pneg %p124
        %p210 = pneg %p121
        %p211 = pneg %p150
        %p212 = pneg %p147
        %s213 = sand.u32 %s137, 1
        %s214 = scalar_lea.sflag [#allocation4], %s213
        %s215 = sand.u32 %s137, 1
        %s216 = smul.addr %s215, 8
        %s217 = scalar_lea.vmem [#allocation3], %s216
        %p218 = scmp.lt.s32.totalorder %s19, 1
        %s219 = scalar_select %p218, %s19, 1
        %s220 = smul.addr %s219, 28
        %s221 = smul.addr %s220, 8
        %s222 = scalar_lea.vmem %s0, %s221
        %v223 = vld [vmem:[%s222] sm:$0xff]
        %v224 = vld [vmem:[%s222 + $0x8] sm:$0xff]
        %v225 = vld [vmem:[%s222 + $0x10] sm:$0xff]
        %v226 = vld [vmem:[%s222 + $0x18] sm:$0xff]
        %v227 = vld [vmem:[%s222 + $0x20] sm:$0xff]
        %v228 = vld [vmem:[%s222 + $0x28] sm:$0xff]
        %v229 = vld [vmem:[%s222 + $0x30] sm:$0xff]
        %v230 = vld [vmem:[%s222 + $0x38] sm:$0xff]
        %v231 = vld [vmem:[%s222 + $0x40] sm:$0xff]
        %v232 = vld [vmem:[%s222 + $0x48] sm:$0xff]
        %v233 = vld [vmem:[%s222 + $0x50] sm:$0xff]
        %v234 = vld [vmem:[%s222 + $0x58] sm:$0xff]
        %v235 = vld [vmem:[%s222 + $0x60] sm:$0xff]
        %v236 = vld [vmem:[%s222 + $0x68] sm:$0xff]
        %v237 = vld [vmem:[%s222 + $0x70] sm:$0xff]
        %v238 = vld [vmem:[%s222 + $0x78] sm:$0xff]
        %v239 = vld [vmem:[%s222 + $0x80] sm:$0xff]
        %v240 = vld [vmem:[%s222 + $0x88] sm:$0xff]
        %v241 = vld [vmem:[%s222 + $0x90] sm:$0xff]
        %v242 = vld [vmem:[%s222 + $0x98] sm:$0xff]
        %v243 = vld [vmem:[%s222 + $0xa0] sm:$0xff]
        %v244 = vld [vmem:[%s222 + $0xa8] sm:$0xff]
        %v245 = vld [vmem:[%s222 + $0xb0] sm:$0xff]
        %v246 = vld [vmem:[%s222 + $0xb8] sm:$0xff]
        %v247 = vld [vmem:[%s222 + $0xc0] sm:$0xff]
        %v248 = vld [vmem:[%s222 + $0xc8] sm:$0xff]
        %v249 = vld [vmem:[%s222 + $0xd0] sm:$0xff]
        %v250 = vld [vmem:[%s222 + $0xd8] sm:$0xff]
        %v251 = vld [vmem:[%s1] sm:$0xff]
        %v252 = vld [vmem:[%s1 + $0x8] sm:$0xff]
        %v253 = vld [vmem:[%s1 + $0x10] sm:$0xff]
        %v254 = vld [vmem:[%s1 + $0x18] sm:$0xff]
        %v255 = vld [vmem:[%s1 + $0x20] sm:$0xff]
        %v256 = vld [vmem:[%s1 + $0x28] sm:$0xff]
        %v257 = vld [vmem:[%s1 + $0x30] sm:$0xff]
        %v258 = vld [vmem:[%s1 + $0x38] sm:$0xff]
        %v259 = vld [vmem:[%s1 + $0x40] sm:$0xff]
        %v260 = vld [vmem:[%s1 + $0x48] sm:$0xff]
        %v261 = vld [vmem:[%s1 + $0x50] sm:$0xff]
        %v262 = vld [vmem:[%s1 + $0x58] sm:$0xff]
        %v263 = vld [vmem:[%s1 + $0x60] sm:$0xff]
        %v264 = vld [vmem:[%s1 + $0x68] sm:$0xff]
        %v265 = vld [vmem:[%s1 + $0x70] sm:$0xff]
        %v266 = vld [vmem:[%s1 + $0x78] sm:$0xff]
        %v267 = vld [vmem:[%s1 + $0x80] sm:$0xff]
        %v268 = vld [vmem:[%s1 + $0x88] sm:$0xff]
        %v269 = vld [vmem:[%s1 + $0x90] sm:$0xff]
        %v270 = vld [vmem:[%s1 + $0x98] sm:$0xff]
        %v271 = vld [vmem:[%s1 + $0xa0] sm:$0xff]
        %v272 = vld [vmem:[%s1 + $0xa8] sm:$0xff]
        %v273 = vld [vmem:[%s1 + $0xb0] sm:$0xff]
        %v274 = vld [vmem:[%s1 + $0xb8] sm:$0xff]
        %v275 = vld [vmem:[%s1 + $0xc0] sm:$0xff]
        %v276 = vld [vmem:[%s1 + $0xc8] sm:$0xff]
        %v277 = vld [vmem:[%s1 + $0xd0] sm:$0xff]
        %v278 = vld [vmem:[%s1 + $0xd8] sm:$0xff]
        %v279 = vld [vmem:[%s1 + $0xe0] sm:$0xff]
        %v280 = vld [vmem:[%s1 + $0xe8] sm:$0xff]
        %v281 = vld [vmem:[%s1 + $0xf0] sm:$0xff]
        %v282 = vld [vmem:[%s1 + $0xf8] sm:$0xff]
        %v283 = vld [vmem:[%s1 + $0x100] sm:$0xff]
        %v284 = vld [vmem:[%s1 + $0x108] sm:$0xff]
        %v285 = vld [vmem:[%s1 + $0x110] sm:$0xff]
        %v286 = vld [vmem:[%s1 + $0x118] sm:$0xff]
        %v287 = vld [vmem:[%s2] sm:$0x3]
        %v289 = vlaneseq
        %v290 = vshrl.u32 %v289, 7
        %v291 = vsub.s32 0, %v290
        %v292 = vrot.slane %v287, %v291
        %v293 = vlaneseq
        %v294 = vshrl.u32 %v293, 7
        %v295 = vsub.s32 1, %v294
        %v296 = vrot.slane %v287, %v295
        %vm299 = vcmask 130048
        %v301 = vsel %vm299, %v224, 0
        %v304 = vsel %vm299, %v226, 0
        %v307 = vsel %vm299, %v228, 0
        %v310 = vsel %vm299, %v230, 0
        %v313 = vsel %vm299, %v232, 0
        %v316 = vsel %vm299, %v234, 0
        %v319 = vsel %vm299, %v236, 0
        %v322 = vsel %vm299, %v238, 0
        %v325 = vsel %vm299, %v240, 0
        %v328 = vsel %vm299, %v242, 0
        %v331 = vsel %vm299, %v244, 0
        %v334 = vsel %vm299, %v246, 0
        %v337 = vsel %vm299, %v248, 0
        %v340 = vsel %vm299, %v250, 0
        %342 = vmatprep.subr.mxu0 %v252
        %343 = vmatpush1.msra.mxu0 %v251
        %344 = vmatprep.subr.mxu0 %v254
        %345 = vmatpush1.msra.mxu0 %v253
        %346 = vmatprep.subr.mxu0 %v256
        %347 = vmatpush1.msra.mxu0 %v255
        %348 = vmatprep.subr.mxu0 %v258
        %349 = vmatpush1.msra.mxu0 %v257
        %350 = vmatprep.subr.mxu0 %v260
        %351 = vmatpush1.msra.mxu0 %v259
        %352 = vmatprep.subr.mxu0 %v262
        %353 = vmatpush1.msra.mxu0 %v261
        %354 = vmatprep.subr.mxu0 %v264
        %355 = vmatpush1.msra.mxu0 %v263
        %356 = vmatprep.subr.mxu0 %v266
        %357 = vmatpush1.msra.mxu0 %v265
        %358 = vmatprep.subr.mxu0 %v268
        %359 = vmatpush1.msra.mxu0 %v267
        %360 = vmatprep.subr.mxu0 %v270
        %361 = vmatpush1.msra.mxu0 %v269
        %362 = vmatprep.subr.mxu0 %v272
        %363 = vmatpush1.msra.mxu0 %v271
        %364 = vmatprep.subr.mxu0 %v274
        %365 = vmatpush1.msra.mxu0 %v273
        %366 = vmatprep.subr.mxu0 %v276
        %367 = vmatpush1.msra.mxu0 %v275
        %368 = vmatprep.subr.mxu0 %v278
        %369 = vmatpush1.msra.mxu0 %v277
        %370 = vmatprep.subr.mxu0 %v280
        %371 = vmatpush1.msra.mxu0 %v279
        %372 = vmatprep.subr.mxu0 %v282
        %373 = vmatpush1.msra.mxu0 %v281
        %374 = vmatprep.subr.mxu0 %v284
        %375 = vmatpush1.msra.mxu0 %v283
        %376 = vmatprep.subr.mxu0 %v286
        %377 = vmatpush1.msra.mxu0 %v285
        %378 = vmatprep.subr.mxu0 0.0
        %379 = vmatpush1.msra.mxu0 0.0
        %380 = vmatprep.subr.mxu0 0.0
        %381 = vmatpush1.msra.mxu0 0.0
        %382 = vmatprep.subr.mxu0 0.0
        %383 = vmatpush1.msra.mxu0 0.0
        %384 = vmatprep.subr.mxu0 0.0
        %385 = vmatpush1.msra.mxu0 0.0
        %386 = vmatprep.subr.mxu0 0.0
        %387 = vmatpush1.msra.mxu0 0.0
        %388 = vmatprep.subr.mxu0 0.0
        %389 = vmatpush1.msra.mxu0 0.0
        %390 = vmatprep.subr.mxu0 0.0
        %391 = vmatpush1.msra.mxu0 0.0
        %392 = vmatprep.subr.mxu0 0.0
        %393 = vmatpush1.msra.mxu0 0.0
        %394 = vmatprep.subr.mxu0 0.0
        %395 = vmatpush1.msra.mxu0 0.0
        %396 = vmatprep.subr.mxu0 0.0
        %397 = vmatpush1.msra.mxu0 0.0
        %398 = vmatprep.subr.mxu0 0.0
        %399 = vmatpush1.msra.mxu0 0.0
        %400 = vmatprep.subr.mxu0 0.0
        %401 = vmatpush1.msra.mxu0 0.0
        %402 = vmatprep.subr.mxu0 0.0
        %403 = vmatpush1.msra.mxu0 0.0
        %404 = vmatprep.subr.mxu0 0.0
        %405 = vmatpush1.msra.mxu0 0.0
        %406 = vmatprep.mubr.f32.mxu0 %v301
        %407 = vmatmul.mubr.f32.gmra.mrb[0].mxu0 %v223
        %v408 = vpop.f32.mrb[0].mxu0
        %v409 = vadd.f32 %v292, %v408
        %v410 = vpop.f32.mrb[0].mxu0
        %v411 = vadd.f32 %v296, %v410
        %412 = vmatprep.mubr.f32.mxu0 %v304
        %413 = vmatmul.mubr.f32.gmra.mrb[0].mxu0 %v225
        %v414 = vpop.f32.mrb[0].mxu0
        %v415 = vadd.f32 %v292, %v414
        %v416 = vpop.f32.mrb[0].mxu0
        %v417 = vadd.f32 %v296, %v416
        %418 = vmatprep.mubr.f32.mxu0 %v307
        %419 = vmatmul.mubr.f32.gmra.mrb[0].mxu0 %v227
        %v420 = vpop.f32.mrb[0].mxu0
        %v421 = vadd.f32 %v292, %v420
        %v422 = vpop.f32.mrb[0].mxu0
        %v423 = vadd.f32 %v296, %v422
        %424 = vmatprep.mubr.f32.mxu0 %v310
        %425 = vmatmul.mubr.f32.gmra.mrb[0].mxu0 %v229
        %v426 = vpop.f32.mrb[0].mxu0
        %v427 = vadd.f32 %v292, %v426
        %v428 = vpop.f32.mrb[0].mxu0
        %v429 = vadd.f32 %v296, %v428
        %430 = vmatprep.mubr.f32.mxu0 %v313
        %431 = vmatmul.mubr.f32.gmra.mrb[0].mxu0 %v231
        %v432 = vpop.f32.mrb[0].mxu0
        %v433 = vadd.f32 %v292, %v432
        %v434 = vpop.f32.mrb[0].mxu0
        %v435 = vadd.f32 %v296, %v434
        %436 = vmatprep.mubr.f32.mxu0 %v316
        %437 = vmatmul.mubr.f32.gmra.mrb[0].mxu0 %v233
        %v438 = vpop.f32.mrb[0].mxu0
        %v439 = vadd.f32 %v292, %v438
        %v440 = vpop.f32.mrb[0].mxu0
        %v441 = vadd.f32 %v296, %v440
        %442 = vmatprep.mubr.f32.mxu0 %v319
        %443 = vmatmul.mubr.f32.gmra.mrb[0].mxu0 %v235
        %v444 = vpop.f32.mrb[0].mxu0
        %v445 = vadd.f32 %v292, %v444
        %v446 = vpop.f32.mrb[0].mxu0
        %v447 = vadd.f32 %v296, %v446
        %448 = vmatprep.mubr.f32.mxu0 %v322
        %449 = vmatmul.mubr.f32.gmra.mrb[0].mxu0 %v237
        %v450 = vpop.f32.mrb[0].mxu0
        %v451 = vadd.f32 %v292, %v450
        %v452 = vpop.f32.mrb[0].mxu0
        %v453 = vadd.f32 %v296, %v452
        %454 = vmatprep.mubr.f32.mxu0 %v325
        %455 = vmatmul.mubr.f32.gmra.mrb[0].mxu0 %v239
        %v456 = vpop.f32.mrb[0].mxu0
        %v457 = vadd.f32 %v292, %v456
        %v458 = vpop.f32.mrb[0].mxu0
        %v459 = vadd.f32 %v296, %v458
        %460 = vmatprep.mubr.f32.mxu0 %v328
        %461 = vmatmul.mubr.f32.gmra.mrb[0].mxu0 %v241
        %v462 = vpop.f32.mrb[0].mxu0
        %v463 = vadd.f32 %v292, %v462
        %v464 = vpop.f32.mrb[0].mxu0
        %v465 = vadd.f32 %v296, %v464
        %466 = vmatprep.mubr.f32.mxu0 %v331
        %467 = vmatmul.mubr.f32.gmra.mrb[0].mxu0 %v243
        %v468 = vpop.f32.mrb[0].mxu0
        %v469 = vadd.f32 %v292, %v468
        %v470 = vpop.f32.mrb[0].mxu0
        %v471 = vadd.f32 %v296, %v470
        %472 = vmatprep.mubr.f32.mxu0 %v334
        %473 = vmatmul.mubr.f32.gmra.mrb[0].mxu0 %v245
        %v474 = vpop.f32.mrb[0].mxu0
        %v475 = vadd.f32 %v292, %v474
        %v476 = vpop.f32.mrb[0].mxu0
        %v477 = vadd.f32 %v296, %v476
        %478 = vmatprep.mubr.f32.mxu0 %v337
        %479 = vmatmul.mubr.f32.gmra.mrb[0].mxu0 %v247
        %v480 = vpop.f32.mrb[0].mxu0
        %v481 = vadd.f32 %v292, %v480
        %v482 = vpop.f32.mrb[0].mxu0
        %v483 = vadd.f32 %v296, %v482
        %484 = vmatprep.mubr.f32.mxu0 %v340
        %485 = vmatmul.mubr.f32.gmra.mrb[0].mxu0 %v249
        %v486 = vpop.f32.mrb[0].mxu0
        %v487 = vadd.f32 %v292, %v486
        %v488 = vpop.f32.mrb[0].mxu0
        %v489 = vadd.f32 %v296, %v488
        %490 = vdwg.mxu0
        %v491 = vmax.f32 %v409, 0.0
        %v492 = vmax.f32 %v411, 0.0
        %v493 = vmax.f32 %v415, 0.0
        %v494 = vmax.f32 %v417, 0.0
        %v495 = vmax.f32 %v421, 0.0
        %v496 = vmax.f32 %v423, 0.0
        %v497 = vmax.f32 %v427, 0.0
        %v498 = vmax.f32 %v429, 0.0
        %v499 = vmax.f32 %v433, 0.0
        %v500 = vmax.f32 %v435, 0.0
        %v501 = vmax.f32 %v439, 0.0
        %v502 = vmax.f32 %v441, 0.0
        %v503 = vmax.f32 %v445, 0.0
        %v504 = vmax.f32 %v447, 0.0
        %v505 = vmax.f32 %v451, 0.0
        %v506 = vmax.f32 %v453, 0.0
        %v507 = vmax.f32 %v457, 0.0
        %v508 = vmax.f32 %v459, 0.0
        %v509 = vmax.f32 %v463, 0.0
        %v510 = vmax.f32 %v465, 0.0
        %v511 = vmax.f32 %v469, 0.0
        %v512 = vmax.f32 %v471, 0.0
        %v513 = vmax.f32 %v475, 0.0
        %v514 = vmax.f32 %v477, 0.0
        %v515 = vmax.f32 %v481, 0.0
        %v516 = vmax.f32 %v483, 0.0
        %v517 = vmax.f32 %v487, 0.0
        %v518 = vmax.f32 %v489, 0.0
        %519 = vst [vmem:[#allocation2] sm:$0xff] %v491
        %vm520 = vcmask 97280
        %521 = vst.msk [vmem:[#allocation2 + $0x8] sm:$0xff] %vm520, %v492
        %522 = vst [vmem:[#allocation2 + $0x10] sm:$0xff] %v493
        %523 = vst.msk [vmem:[#allocation2 + $0x18] sm:$0xff] %vm520, %v494
        %524 = vst [vmem:[#allocation2 + $0x20] sm:$0xff] %v495
        %525 = vst.msk [vmem:[#allocation2 + $0x28] sm:$0xff] %vm520, %v496
        %526 = vst [vmem:[#allocation2 + $0x30] sm:$0xff] %v497
        %527 = vst.msk [vmem:[#allocation2 + $0x38] sm:$0xff] %vm520, %v498
        %528 = vst [vmem:[#allocation2 + $0x40] sm:$0xff] %v499
        %529 = vst.msk [vmem:[#allocation2 + $0x48] sm:$0xff] %vm520, %v500
        %530 = vst [vmem:[#allocation2 + $0x50] sm:$0xff] %v501
        %531 = vst.msk [vmem:[#allocation2 + $0x58] sm:$0xff] %vm520, %v502
        %532 = vst [vmem:[#allocation2 + $0x60] sm:$0xff] %v503
        %533 = vst.msk [vmem:[#allocation2 + $0x68] sm:$0xff] %vm520, %v504
        %534 = vst [vmem:[#allocation2 + $0x70] sm:$0xff] %v505
        %535 = vst.msk [vmem:[#allocation2 + $0x78] sm:$0xff] %vm520, %v506
        %536 = vst [vmem:[#allocation2 + $0x80] sm:$0xff] %v507
        %537 = vst.msk [vmem:[#allocation2 + $0x88] sm:$0xff] %vm520, %v508
        %538 = vst [vmem:[#allocation2 + $0x90] sm:$0xff] %v509
        %539 = vst.msk [vmem:[#allocation2 + $0x98] sm:$0xff] %vm520, %v510
        %540 = vst [vmem:[#allocation2 + $0xa0] sm:$0xff] %v511
        %541 = vst.msk [vmem:[#allocation2 + $0xa8] sm:$0xff] %vm520, %v512
        %542 = vst [vmem:[#allocation2 + $0xb0] sm:$0xff] %v513
        %543 = vst.msk [vmem:[#allocation2 + $0xb8] sm:$0xff] %vm520, %v514
        %544 = vst [vmem:[#allocation2 + $0xc0] sm:$0xff] %v515
        %545 = vst.msk [vmem:[#allocation2 + $0xc8] sm:$0xff] %vm520, %v516
        %546 = vst [vmem:[#allocation2 + $0xd0] sm:$0xff] %v517
        %547 = vst.msk [vmem:[#allocation2 + $0xd8] sm:$0xff] %vm520, %v518
        %v548 = vld [vmem:[#allocation2] sm:$0xff]
        %v549 = vld [vmem:[#allocation2 + $0x8] sm:$0xff]
        %v550 = vld [vmem:[%s3] sm:$0xff]
        %v551 = vld [vmem:[%s3 + $0x8] sm:$0xff]
        %v552 = vld [vmem:[%s3 + $0x10] sm:$0xff]
        %v553 = vld [vmem:[%s3 + $0x18] sm:$0xff]
        %v554 = vld [vmem:[%s3 + $0x20] sm:$0xff]
        %v555 = vld [vmem:[%s3 + $0x28] sm:$0xff]
        %v556 = vld [vmem:[%s3 + $0x30] sm:$0xff]
        %v557 = vld [vmem:[%s3 + $0x38] sm:$0xff]
        %v558 = vld [vmem:[%s3 + $0x40] sm:$0xff]
        %v559 = vld [vmem:[%s3 + $0x48] sm:$0xff]
        %v560 = vld [vmem:[%s3 + $0x50] sm:$0xff]
        %v561 = vld [vmem:[%s3 + $0x58] sm:$0xff]
        %v562 = vld [vmem:[%s3 + $0x60] sm:$0xff]
        %v563 = vld [vmem:[%s3 + $0x68] sm:$0xff]
        %v564 = vld [vmem:[%s3 + $0x70] sm:$0xff]
        %v565 = vld [vmem:[%s3 + $0x78] sm:$0xff]
        %v566 = vld [vmem:[%s3 + $0x80] sm:$0xff]
        %v567 = vld [vmem:[%s3 + $0x88] sm:$0xf]
        %v568 = vld [vmem:[#allocation2 + $0x10] sm:$0xff]
        %v569 = vld [vmem:[#allocation2 + $0x18] sm:$0xff]
        %s570 = scalar_lea.vmem %s3, 144
        %v571 = vld [vmem:[%s570] sm:$0xff]
        %v572 = vld [vmem:[%s570 + $0x8] sm:$0xff]
        %v573 = vld [vmem:[%s570 + $0x10] sm:$0xff]
        %v574 = vld [vmem:[%s570 + $0x18] sm:$0xff]
        %v575 = vld [vmem:[%s570 + $0x20] sm:$0xff]
        %v576 = vld [vmem:[%s570 + $0x28] sm:$0xff]
        %v577 = vld [vmem:[%s570 + $0x30] sm:$0xff]
        %v578 = vld [vmem:[%s570 + $0x38] sm:$0xff]
        %v579 = vld [vmem:[%s570 + $0x40] sm:$0xff]
        %v580 = vld [vmem:[%s570 + $0x48] sm:$0xff]
        %v581 = vld [vmem:[%s570 + $0x50] sm:$0xff]
        %v582 = vld [vmem:[%s570 + $0x58] sm:$0xff]
        %v583 = vld [vmem:[%s570 + $0x60] sm:$0xff]
        %v584 = vld [vmem:[%s570 + $0x68] sm:$0xff]
        %v585 = vld [vmem:[%s570 + $0x70] sm:$0xff]
        %v586 = vld [vmem:[%s570 + $0x78] sm:$0xff]
        %v587 = vld [vmem:[%s570 + $0x80] sm:$0xff]
        %v588 = vld [vmem:[%s570 + $0x88] sm:$0xf]
        %v590 = vsel %vm520, %v569, 0
        %vm592 = vcmask 1043456
        %v594 = vsel %vm592, %v588, 0
        %596 = vmatprep.subr.mxu0 0.0
        %597 = vmatpush1.msra.mxu0 %v571
        %598 = vmatprep.subr.mxu0 0.0
        %599 = vmatpush1.msra.mxu0 %v572
        %600 = vmatprep.subr.mxu0 0.0
        %601 = vmatpush1.msra.mxu0 %v573
        %602 = vmatprep.subr.mxu0 0.0
        %603 = vmatpush1.msra.mxu0 %v574
        %604 = vmatprep.subr.mxu0 0.0
        %605 = vmatpush1.msra.mxu0 %v575
        %606 = vmatprep.subr.mxu0 0.0
        %607 = vmatpush1.msra.mxu0 %v576
        %608 = vmatprep.subr.mxu0 0.0
        %609 = vmatpush1.msra.mxu0 %v577
        %610 = vmatprep.subr.mxu0 0.0
        %611 = vmatpush1.msra.mxu0 %v578
        %612 = vmatprep.subr.mxu0 0.0
        %613 = vmatpush1.msra.mxu0 %v579
        %614 = vmatprep.subr.mxu0 0.0
        %615 = vmatpush1.msra.mxu0 %v580
        %616 = vmatprep.subr.mxu0 0.0
        %617 = vmatpush1.msra.mxu0 %v581
        %618 = vmatprep.subr.mxu0 0.0
        %619 = vmatpush1.msra.mxu0 %v582
        %620 = vmatprep.subr.mxu0 0.0
        %621 = vmatpush1.msra.mxu0 %v583
        %622 = vmatprep.subr.mxu0 0.0
        %623 = vmatpush1.msra.mxu0 %v584
        %624 = vmatprep.subr.mxu0 0.0
        %625 = vmatpush1.msra.mxu0 %v585
        %626 = vmatprep.subr.mxu0 0.0
        %627 = vmatpush1.msra.mxu0 %v586
        %628 = vmatprep.subr.mxu0 0.0
        %629 = vmatpush1.msra.mxu0 %v587
        %630 = vmatprep.subr.mxu0 0.0
        %631 = vmatpush1.msra.mxu0 %v594
        %632 = vmatprep.subr.mxu0 0.0
        %633 = vmatpush1.msra.mxu0 0.0
        %634 = vmatprep.subr.mxu0 0.0
        %635 = vmatpush1.msra.mxu0 0.0
        %636 = vmatprep.subr.mxu0 0.0
        %637 = vmatpush1.msra.mxu0 0.0
        %638 = vmatprep.subr.mxu0 0.0
        %639 = vmatpush1.msra.mxu0 0.0
        %640 = vmatprep.subr.mxu0 0.0
        %641 = vmatpush1.msra.mxu0 0.0
        %642 = vmatprep.subr.mxu0 0.0
        %643 = vmatpush1.msra.mxu0 0.0
        %644 = vmatprep.subr.mxu0 0.0
        %645 = vmatpush1.msra.mxu0 0.0
        %646 = vmatprep.subr.mxu0 0.0
        %647 = vmatpush1.msra.mxu0 0.0
        %648 = vmatprep.subr.mxu0 0.0
        %649 = vmatpush1.msra.mxu0 0.0
        %650 = vmatprep.subr.mxu0 0.0
        %651 = vmatpush1.msra.mxu0 0.0
        %652 = vmatprep.subr.mxu0 0.0
        %653 = vmatpush1.msra.mxu0 0.0
        %654 = vmatprep.subr.mxu0 0.0
        %655 = vmatpush1.msra.mxu0 0.0
        %656 = vmatprep.subr.mxu0 0.0
        %657 = vmatpush1.msra.mxu0 0.0
        %658 = vmatprep.subr.mxu0 0.0
        %659 = vmatpush1.msra.mxu0 0.0
        %660 = vmatprep.mubr.f32.mxu0 %v590
        %661 = vmatmul.mubr.f32.gmra.mrb[0].mxu0 %v568
        %v662 = vpop.f32.mrb[0].mxu0
        %v663 = vadd.f32 0.0, %v662
        %v664 = vpop.f32.mrb[0].mxu0
        %665 = vdwg.mxu0
        %v667 = vsel %vm520, %v549, 0
        %v670 = vsel %vm592, %v567, 0
        %672 = vmatprep.subr.mxu0 0.0
        %673 = vmatpush1.msra.mxu0 %v550
        %674 = vmatprep.subr.mxu0 0.0
        %675 = vmatpush1.msra.mxu0 %v551
        %676 = vmatprep.subr.mxu0 0.0
        %677 = vmatpush1.msra.mxu0 %v552
        %678 = vmatprep.subr.mxu0 0.0
        %679 = vmatpush1.msra.mxu0 %v553
        %680 = vmatprep.subr.mxu0 0.0
        %681 = vmatpush1.msra.mxu0 %v554
        %682 = vmatprep.subr.mxu0 0.0
        %683 = vmatpush1.msra.mxu0 %v555
        %684 = vmatprep.subr.mxu0 0.0
        %685 = vmatpush1.msra.mxu0 %v556
        %686 = vmatprep.subr.mxu0 0.0
        %687 = vmatpush1.msra.mxu0 %v557
        %688 = vmatprep.subr.mxu0 0.0
        %689 = vmatpush1.msra.mxu0 %v558
        %690 = vmatprep.subr.mxu0 0.0
        %691 = vmatpush1.msra.mxu0 %v559
        %692 = vmatprep.subr.mxu0 0.0
        %693 = vmatpush1.msra.mxu0 %v560
        %694 = vmatprep.subr.mxu0 0.0
        %695 = vmatpush1.msra.mxu0 %v561
        %696 = vmatprep.subr.mxu0 0.0
        %697 = vmatpush1.msra.mxu0 %v562
        %698 = vmatprep.subr.mxu0 0.0
        %699 = vmatpush1.msra.mxu0 %v563
        %700 = vmatprep.subr.mxu0 0.0
        %701 = vmatpush1.msra.mxu0 %v564
        %702 = vmatprep.subr.mxu0 0.0
        %703 = vmatpush1.msra.mxu0 %v565
        %704 = vmatprep.subr.mxu0 0.0
        %705 = vmatpush1.msra.mxu0 %v566
        %706 = vmatprep.subr.mxu0 0.0
        %707 = vmatpush1.msra.mxu0 %v670
        %708 = vmatprep.subr.mxu0 0.0
        %709 = vmatpush1.msra.mxu0 0.0
        %710 = vmatprep.subr.mxu0 0.0
        %711 = vmatpush1.msra.mxu0 0.0
        %712 = vmatprep.subr.mxu0 0.0
        %713 = vmatpush1.msra.mxu0 0.0
        %714 = vmatprep.subr.mxu0 0.0
        %715 = vmatpush1.msra.mxu0 0.0
        %716 = vmatprep.subr.mxu0 0.0
        %717 = vmatpush1.msra.mxu0 0.0
        %718 = vmatprep.subr.mxu0 0.0
        %719 = vmatpush1.msra.mxu0 0.0
        %720 = vmatprep.subr.mxu0 0.0
        %721 = vmatpush1.msra.mxu0 0.0
        %722 = vmatprep.subr.mxu0 0.0
        %723 = vmatpush1.msra.mxu0 0.0
        %724 = vmatprep.subr.mxu0 0.0
        %725 = vmatpush1.msra.mxu0 0.0
        %726 = vmatprep.subr.mxu0 0.0
        %727 = vmatpush1.msra.mxu0 0.0
        %728 = vmatprep.subr.mxu0 0.0
        %729 = vmatpush1.msra.mxu0 0.0
        %730 = vmatprep.subr.mxu0 0.0
        %731 = vmatpush1.msra.mxu0 0.0
        %732 = vmatprep.subr.mxu0 0.0
        %733 = vmatpush1.msra.mxu0 0.0
        %734 = vmatprep.subr.mxu0 0.0
        %735 = vmatpush1.msra.mxu0 0.0
        %736 = vmatprep.mubr.f32.mxu0 %v667
        %737 = vmatmul.mubr.f32.gmra.mrb[0].mxu0 %v548
        %v738 = vpop.f32.mrb[0].mxu0
        %v739 = vadd.f32 %v663, %v738
        %v740 = vpop.f32.mrb[0].mxu0
        %741 = vdwg.mxu0
        %v742 = vld [vmem:[#allocation2 + $0x20] sm:$0xff]
        %v743 = vld [vmem:[#allocation2 + $0x28] sm:$0xff]
        %s744 = scalar_lea.vmem %s3, 288
        %v745 = vld [vmem:[%s744] sm:$0xff]
        %v746 = vld [vmem:[%s744 + $0x8] sm:$0xff]
        %v747 = vld [vmem:[%s744 + $0x10] sm:$0xff]
        %v748 = vld [vmem:[%s744 + $0x18] sm:$0xff]
        %v749 = vld [vmem:[%s744 + $0x20] sm:$0xff]
        %v750 = vld [vmem:[%s744 + $0x28] sm:$0xff]
        %v751 = vld [vmem:[%s744 + $0x30] sm:$0xff]
        %v752 = vld [vmem:[%s744 + $0x38] sm:$0xff]
        %v753 = vld [vmem:[%s744 + $0x40] sm:$0xff]
        %v754 = vld [vmem:[%s744 + $0x48] sm:$0xff]
        %v755 = vld [vmem:[%s744 + $0x50] sm:$0xff]
        %v756 = vld [vmem:[%s744 + $0x58] sm:$0xff]
        %v757 = vld [vmem:[%s744 + $0x60] sm:$0xff]
        %v758 = vld [vmem:[%s744 + $0x68] sm:$0xff]
        %v759 = vld [vmem:[%s744 + $0x70] sm:$0xff]
        %v760 = vld [vmem:[%s744 + $0x78] sm:$0xff]
        %v761 = vld [vmem:[%s744 + $0x80] sm:$0xff]
        %v762 = vld [vmem:[%s744 + $0x88] sm:$0xf]
        %v764 = vsel %vm520, %v743, 0
        %v767 = vsel %vm592, %v762, 0
        %769 = vmatprep.subr.mxu0 0.0
        %770 = vmatpush1.msra.mxu0 %v745
        %771 = vmatprep.subr.mxu0 0.0
        %772 = vmatpush1.msra.mxu0 %v746
        %773 = vmatprep.subr.mxu0 0.0
        %774 = vmatpush1.msra.mxu0 %v747
        %775 = vmatprep.subr.mxu0 0.0
        %776 = vmatpush1.msra.mxu0 %v748
        %777 = vmatprep.subr.mxu0 0.0
        %778 = vmatpush1.msra.mxu0 %v749
        %779 = vmatprep.subr.mxu0 0.0
        %780 = vmatpush1.msra.mxu0 %v750
        %781 = vmatprep.subr.mxu0 0.0
        %782 = vmatpush1.msra.mxu0 %v751
        %783 = vmatprep.subr.mxu0 0.0
        %784 = vmatpush1.msra.mxu0 %v752
        %785 = vmatprep.subr.mxu0 0.0
        %786 = vmatpush1.msra.mxu0 %v753
        %787 = vmatprep.subr.mxu0 0.0
        %788 = vmatpush1.msra.mxu0 %v754
        %789 = vmatprep.subr.mxu0 0.0
        %790 = vmatpush1.msra.mxu0 %v755
        %791 = vmatprep.subr.mxu0 0.0
        %792 = vmatpush1.msra.mxu0 %v756
        %793 = vmatprep.subr.mxu0 0.0
        %794 = vmatpush1.msra.mxu0 %v757
        %795 = vmatprep.subr.mxu0 0.0
        %796 = vmatpush1.msra.mxu0 %v758
        %797 = vmatprep.subr.mxu0 0.0
        %798 = vmatpush1.msra.mxu0 %v759
        %799 = vmatprep.subr.mxu0 0.0
        %800 = vmatpush1.msra.mxu0 %v760
        %801 = vmatprep.subr.mxu0 0.0
        %802 = vmatpush1.msra.mxu0 %v761
        %803 = vmatprep.subr.mxu0 0.0
        %804 = vmatpush1.msra.mxu0 %v767
        %805 = vmatprep.subr.mxu0 0.0
        %806 = vmatpush1.msra.mxu0 0.0
        %807 = vmatprep.subr.mxu0 0.0
        %808 = vmatpush1.msra.mxu0 0.0
        %809 = vmatprep.subr.mxu0 0.0
        %810 = vmatpush1.msra.mxu0 0.0
        %811 = vmatprep.subr.mxu0 0.0
        %812 = vmatpush1.msra.mxu0 0.0
        %813 = vmatprep.subr.mxu0 0.0
        %814 = vmatpush1.msra.mxu0 0.0
        %815 = vmatprep.subr.mxu0 0.0
        %816 = vmatpush1.msra.mxu0 0.0
        %817 = vmatprep.subr.mxu0 0.0
        %818 = vmatpush1.msra.mxu0 0.0
        %819 = vmatprep.subr.mxu0 0.0
        %820 = vmatpush1.msra.mxu0 0.0
        %821 = vmatprep.subr.mxu0 0.0
        %822 = vmatpush1.msra.mxu0 0.0
        %823 = vmatprep.subr.mxu0 0.0
        %824 = vmatpush1.msra.mxu0 0.0
        %825 = vmatprep.subr.mxu0 0.0
        %826 = vmatpush1.msra.mxu0 0.0
        %827 = vmatprep.subr.mxu0 0.0
        %828 = vmatpush1.msra.mxu0 0.0
        %829 = vmatprep.subr.mxu0 0.0
        %830 = vmatpush1.msra.mxu0 0.0
        %831 = vmatprep.subr.mxu0 0.0
        %832 = vmatpush1.msra.mxu0 0.0
        %833 = vmatprep.mubr.f32.mxu0 %v764
        %834 = vmatmul.mubr.f32.gmra.mrb[0].mxu0 %v742
        %v835 = vpop.f32.mrb[0].mxu0
        %v836 = vadd.f32 0.0, %v835
        %v837 = vpop.f32.mrb[0].mxu0
        %838 = vdwg.mxu0
        %v839 = vadd.f32 %v739, %v836
        %v840 = vld [vmem:[#allocation2 + $0x30] sm:$0xff]
        %v841 = vld [vmem:[#allocation2 + $0x38] sm:$0xff]
        %s842 = scalar_lea.vmem %s3, 432
        %v843 = vld [vmem:[%s842] sm:$0xff]
        %v844 = vld [vmem:[%s842 + $0x8] sm:$0xff]
        %v845 = vld [vmem:[%s842 + $0x10] sm:$0xff]
        %v846 = vld [vmem:[%s842 + $0x18] sm:$0xff]
        %v847 = vld [vmem:[%s842 + $0x20] sm:$0xff]
        %v848 = vld [vmem:[%s842 + $0x28] sm:$0xff]
        %v849 = vld [vmem:[%s842 + $0x30] sm:$0xff]
        %v850 = vld [vmem:[%s842 + $0x38] sm:$0xff]
        %v851 = vld [vmem:[%s842 + $0x40] sm:$0xff]
        %v852 = vld [vmem:[%s842 + $0x48] sm:$0xff]
        %v853 = vld [vmem:[%s842 + $0x50] sm:$0xff]
        %v854 = vld [vmem:[%s842 + $0x58] sm:$0xff]
        %v855 = vld [vmem:[%s842 + $0x60] sm:$0xff]
        %v856 = vld [vmem:[%s842 + $0x68] sm:$0xff]
        %v857 = vld [vmem:[%s842 + $0x70] sm:$0xff]
        %v858 = vld [vmem:[%s842 + $0x78] sm:$0xff]
        %v859 = vld [vmem:[%s842 + $0x80] sm:$0xff]
        %v860 = vld [vmem:[%s842 + $0x88] sm:$0xf]
        %v862 = vsel %vm520, %v841, 0
        %v865 = vsel %vm592, %v860, 0
        %867 = vmatprep.subr.mxu0 0.0
        %868 = vmatpush1.msra.mxu0 %v843
        %869 = vmatprep.subr.mxu0 0.0
        %870 = vmatpush1.msra.mxu0 %v844
        %871 = vmatprep.subr.mxu0 0.0
        %872 = vmatpush1.msra.mxu0 %v845
        %873 = vmatprep.subr.mxu0 0.0
        %874 = vmatpush1.msra.mxu0 %v846
        %875 = vmatprep.subr.mxu0 0.0
        %876 = vmatpush1.msra.mxu0 %v847
        %877 = vmatprep.subr.mxu0 0.0
        %878 = vmatpush1.msra.mxu0 %v848
        %879 = vmatprep.subr.mxu0 0.0
        %880 = vmatpush1.msra.mxu0 %v849
        %881 = vmatprep.subr.mxu0 0.0
        %882 = vmatpush1.msra.mxu0 %v850
        %883 = vmatprep.subr.mxu0 0.0
        %884 = vmatpush1.msra.mxu0 %v851
        %885 = vmatprep.subr.mxu0 0.0
        %886 = vmatpush1.msra.mxu0 %v852
        %887 = vmatprep.subr.mxu0 0.0
        %888 = vmatpush1.msra.mxu0 %v853
        %889 = vmatprep.subr.mxu0 0.0
        %890 = vmatpush1.msra.mxu0 %v854
        %891 = vmatprep.subr.mxu0 0.0
        %892 = vmatpush1.msra.mxu0 %v855
        %893 = vmatprep.subr.mxu0 0.0
        %894 = vmatpush1.msra.mxu0 %v856
        %895 = vmatprep.subr.mxu0 0.0
        %896 = vmatpush1.msra.mxu0 %v857
        %897 = vmatprep.subr.mxu0 0.0
        %898 = vmatpush1.msra.mxu0 %v858
        %899 = vmatprep.subr.mxu0 0.0
        %900 = vmatpush1.msra.mxu0 %v859
        %901 = vmatprep.subr.mxu0 0.0
        %902 = vmatpush1.msra.mxu0 %v865
        %903 = vmatprep.subr.mxu0 0.0
        %904 = vmatpush1.msra.mxu0 0.0
        %905 = vmatprep.subr.mxu0 0.0
        %906 = vmatpush1.msra.mxu0 0.0
        %907 = vmatprep.subr.mxu0 0.0
        %908 = vmatpush1.msra.mxu0 0.0
        %909 = vmatprep.subr.mxu0 0.0
        %910 = vmatpush1.msra.mxu0 0.0
        %911 = vmatprep.subr.mxu0 0.0
        %912 = vmatpush1.msra.mxu0 0.0
        %913 = vmatprep.subr.mxu0 0.0
        %914 = vmatpush1.msra.mxu0 0.0
        %915 = vmatprep.subr.mxu0 0.0
        %916 = vmatpush1.msra.mxu0 0.0
        %917 = vmatprep.subr.mxu0 0.0
        %918 = vmatpush1.msra.mxu0 0.0
        %919 = vmatprep.subr.mxu0 0.0
        %920 = vmatpush1.msra.mxu0 0.0
        %921 = vmatprep.subr.mxu0 0.0
        %922 = vmatpush1.msra.mxu0 0.0
        %923 = vmatprep.subr.mxu0 0.0
        %924 = vmatpush1.msra.mxu0 0.0
        %925 = vmatprep.subr.mxu0 0.0
        %926 = vmatpush1.msra.mxu0 0.0
        %927 = vmatprep.subr.mxu0 0.0
        %928 = vmatpush1.msra.mxu0 0.0
        %929 = vmatprep.subr.mxu0 0.0
        %930 = vmatpush1.msra.mxu0 0.0
        %931 = vmatprep.mubr.f32.mxu0 %v862
        %932 = vmatmul.mubr.f32.gmra.mrb[0].mxu0 %v840
        %v933 = vpop.f32.mrb[0].mxu0
        %v934 = vadd.f32 0.0, %v933
        %v935 = vpop.f32.mrb[0].mxu0
        %936 = vdwg.mxu0
        %v937 = vadd.f32 %v839, %v934
        %v938 = vld [vmem:[#allocation2 + $0x40] sm:$0xff]
        %v939 = vld [vmem:[#allocation2 + $0x48] sm:$0xff]
        %s940 = scalar_lea.vmem %s3, 576
        %v941 = vld [vmem:[%s940] sm:$0xff]
        %v942 = vld [vmem:[%s940 + $0x8] sm:$0xff]
        %v943 = vld [vmem:[%s940 + $0x10] sm:$0xff]
        %v944 = vld [vmem:[%s940 + $0x18] sm:$0xff]
        %v945 = vld [vmem:[%s940 + $0x20] sm:$0xff]
        %v946 = vld [vmem:[%s940 + $0x28] sm:$0xff]
        %v947 = vld [vmem:[%s940 + $0x30] sm:$0xff]
        %v948 = vld [vmem:[%s940 + $0x38] sm:$0xff]
        %v949 = vld [vmem:[%s940 + $0x40] sm:$0xff]
        %v950 = vld [vmem:[%s940 + $0x48] sm:$0xff]
        %v951 = vld [vmem:[%s940 + $0x50] sm:$0xff]
        %v952 = vld [vmem:[%s940 + $0x58] sm:$0xff]
        %v953 = vld [vmem:[%s940 + $0x60] sm:$0xff]
        %v954 = vld [vmem:[%s940 + $0x68] sm:$0xff]
        %v955 = vld [vmem:[%s940 + $0x70] sm:$0xff]
        %v956 = vld [vmem:[%s940 + $0x78] sm:$0xff]
        %v957 = vld [vmem:[%s940 + $0x80] sm:$0xff]
        %v958 = vld [vmem:[%s940 + $0x88] sm:$0xf]
        %v960 = vsel %vm520, %v939, 0
        %v963 = vsel %vm592, %v958, 0
        %965 = vmatprep.subr.mxu0 0.0
        %966 = vmatpush1.msra.mxu0 %v941
        %967 = vmatprep.subr.mxu0 0.0
        %968 = vmatpush1.msra.mxu0 %v942
        %969 = vmatprep.subr.mxu0 0.0
        %970 = vmatpush1.msra.mxu0 %v943
        %971 = vmatprep.subr.mxu0 0.0
        %972 = vmatpush1.msra.mxu0 %v944
        %973 = vmatprep.subr.mxu0 0.0
        %974 = vmatpush1.msra.mxu0 %v945
        %975 = vmatprep.subr.mxu0 0.0
        %976 = vmatpush1.msra.mxu0 %v946
        %977 = vmatprep.subr.mxu0 0.0
        %978 = vmatpush1.msra.mxu0 %v947
        %979 = vmatprep.subr.mxu0 0.0
        %980 = vmatpush1.msra.mxu0 %v948
        %981 = vmatprep.subr.mxu0 0.0
        %982 = vmatpush1.msra.mxu0 %v949
        %983 = vmatprep.subr.mxu0 0.0
        %984 = vmatpush1.msra.mxu0 %v950
        %985 = vmatprep.subr.mxu0 0.0
        %986 = vmatpush1.msra.mxu0 %v951
        %987 = vmatprep.subr.mxu0 0.0
        %988 = vmatpush1.msra.mxu0 %v952
        %989 = vmatprep.subr.mxu0 0.0
        %990 = vmatpush1.msra.mxu0 %v953
        %991 = vmatprep.subr.mxu0 0.0
        %992 = vmatpush1.msra.mxu0 %v954
        %993 = vmatprep.subr.mxu0 0.0
        %994 = vmatpush1.msra.mxu0 %v955
        %995 = vmatprep.subr.mxu0 0.0
        %996 = vmatpush1.msra.mxu0 %v956
        %997 = vmatprep.subr.mxu0 0.0
        %998 = vmatpush1.msra.mxu0 %v957
        %999 = vmatprep.subr.mxu0 0.0
        %1000 = vmatpush1.msra.mxu0 %v963
        %1001 = vmatprep.subr.mxu0 0.0
        %1002 = vmatpush1.msra.mxu0 0.0
        %1003 = vmatprep.subr.mxu0 0.0
        %1004 = vmatpush1.msra.mxu0 0.0
        %1005 = vmatprep.subr.mxu0 0.0
        %1006 = vmatpush1.msra.mxu0 0.0
        %1007 = vmatprep.subr.mxu0 0.0
        %1008 = vmatpush1.msra.mxu0 0.0
        %1009 = vmatprep.subr.mxu0 0.0
        %1010 = vmatpush1.msra.mxu0 0.0
        %1011 = vmatprep.subr.mxu0 0.0
        %1012 = vmatpush1.msra.mxu0 0.0
        %1013 = vmatprep.subr.mxu0 0.0
        %1014 = vmatpush1.msra.mxu0 0.0
        %1015 = vmatprep.subr.mxu0 0.0
        %1016 = vmatpush1.msra.mxu0 0.0
        %1017 = vmatprep.subr.mxu0 0.0
        %1018 = vmatpush1.msra.mxu0 0.0
        %1019 = vmatprep.subr.mxu0 0.0
        %1020 = vmatpush1.msra.mxu0 0.0
        %1021 = vmatprep.subr.mxu0 0.0
        %1022 = vmatpush1.msra.mxu0 0.0
        %1023 = vmatprep.subr.mxu0 0.0
        %1024 = vmatpush1.msra.mxu0 0.0
        %1025 = vmatprep.subr.mxu0 0.0
        %1026 = vmatpush1.msra.mxu0 0.0
        %1027 = vmatprep.subr.mxu0 0.0
        %1028 = vmatpush1.msra.mxu0 0.0
        %1029 = vmatprep.mubr.f32.mxu0 %v960
        %1030 = vmatmul.mubr.f32.gmra.mrb[0].mxu0 %v938
        %v1031 = vpop.f32.mrb[0].mxu0
        %v1032 = vadd.f32 0.0, %v1031
        %v1033 = vpop.f32.mrb[0].mxu0
        %1034 = vdwg.mxu0
        %v1035 = vadd.f32 %v937, %v1032
        %v1036 = vld [vmem:[#allocation2 + $0x50] sm:$0xff]
        %v1037 = vld [vmem:[#allocation2 + $0x58] sm:$0xff]
        %s1038 = scalar_lea.vmem %s3, 720
        %v1039 = vld [vmem:[%s1038] sm:$0xff]
        %v1040 = vld [vmem:[%s1038 + $0x8] sm:$0xff]
        %v1041 = vld [vmem:[%s1038 + $0x10] sm:$0xff]
        %v1042 = vld [vmem:[%s1038 + $0x18] sm:$0xff]
        %v1043 = vld [vmem:[%s1038 + $0x20] sm:$0xff]
        %v1044 = vld [vmem:[%s1038 + $0x28] sm:$0xff]
        %v1045 = vld [vmem:[%s1038 + $0x30] sm:$0xff]
        %v1046 = vld [vmem:[%s1038 + $0x38] sm:$0xff]
        %v1047 = vld [vmem:[%s1038 + $0x40] sm:$0xff]
        %v1048 = vld [vmem:[%s1038 + $0x48] sm:$0xff]
        %v1049 = vld [vmem:[%s1038 + $0x50] sm:$0xff]
        %v1050 = vld [vmem:[%s1038 + $0x58] sm:$0xff]
        %v1051 = vld [vmem:[%s1038 + $0x60] sm:$0xff]
        %v1052 = vld [vmem:[%s1038 + $0x68] sm:$0xff]
        %v1053 = vld [vmem:[%s1038 + $0x70] sm:$0xff]
        %v1054 = vld [vmem:[%s1038 + $0x78] sm:$0xff]
        %v1055 = vld [vmem:[%s1038 + $0x80] sm:$0xff]
        %v1056 = vld [vmem:[%s1038 + $0x88] sm:$0xf]
        %v1058 = vsel %vm520, %v1037, 0
        %v1061 = vsel %vm592, %v1056, 0
        %1063 = vmatprep.subr.mxu0 0.0
        %1064 = vmatpush1.msra.mxu0 %v1039
        %1065 = vmatprep.subr.mxu0 0.0
        %1066 = vmatpush1.msra.mxu0 %v1040
        %1067 = vmatprep.subr.mxu0 0.0
        %1068 = vmatpush1.msra.mxu0 %v1041
        %1069 = vmatprep.subr.mxu0 0.0
        %1070 = vmatpush1.msra.mxu0 %v1042
        %1071 = vmatprep.subr.mxu0 0.0
        %1072 = vmatpush1.msra.mxu0 %v1043
        %1073 = vmatprep.subr.mxu0 0.0
        %1074 = vmatpush1.msra.mxu0 %v1044
        %1075 = vmatprep.subr.mxu0 0.0
        %1076 = vmatpush1.msra.mxu0 %v1045
        %1077 = vmatprep.subr.mxu0 0.0
        %1078 = vmatpush1.msra.mxu0 %v1046
        %1079 = vmatprep.subr.mxu0 0.0
        %1080 = vmatpush1.msra.mxu0 %v1047
        %1081 = vmatprep.subr.mxu0 0.0
        %1082 = vmatpush1.msra.mxu0 %v1048
        %1083 = vmatprep.subr.mxu0 0.0
        %1084 = vmatpush1.msra.mxu0 %v1049
        %1085 = vmatprep.subr.mxu0 0.0
        %1086 = vmatpush1.msra.mxu0 %v1050
        %1087 = vmatprep.subr.mxu0 0.0
        %1088 = vmatpush1.msra.mxu0 %v1051
        %1089 = vmatprep.subr.mxu0 0.0
        %1090 = vmatpush1.msra.mxu0 %v1052
        %1091 = vmatprep.subr.mxu0 0.0
        %1092 = vmatpush1.msra.mxu0 %v1053
        %1093 = vmatprep.subr.mxu0 0.0
        %1094 = vmatpush1.msra.mxu0 %v1054
        %1095 = vmatprep.subr.mxu0 0.0
        %1096 = vmatpush1.msra.mxu0 %v1055
        %1097 = vmatprep.subr.mxu0 0.0
        %1098 = vmatpush1.msra.mxu0 %v1061
        %1099 = vmatprep.subr.mxu0 0.0
        %1100 = vmatpush1.msra.mxu0 0.0
        %1101 = vmatprep.subr.mxu0 0.0
        %1102 = vmatpush1.msra.mxu0 0.0
        %1103 = vmatprep.subr.mxu0 0.0
        %1104 = vmatpush1.msra.mxu0 0.0
        %1105 = vmatprep.subr.mxu0 0.0
        %1106 = vmatpush1.msra.mxu0 0.0
        %1107 = vmatprep.subr.mxu0 0.0
        %1108 = vmatpush1.msra.mxu0 0.0
        %1109 = vmatprep.subr.mxu0 0.0
        %1110 = vmatpush1.msra.mxu0 0.0
        %1111 = vmatprep.subr.mxu0 0.0
        %1112 = vmatpush1.msra.mxu0 0.0
        %1113 = vmatprep.subr.mxu0 0.0
        %1114 = vmatpush1.msra.mxu0 0.0
        %1115 = vmatprep.subr.mxu0 0.0
        %1116 = vmatpush1.msra.mxu0 0.0
        %1117 = vmatprep.subr.mxu0 0.0
        %1118 = vmatpush1.msra.mxu0 0.0
        %1119 = vmatprep.subr.mxu0 0.0
        %1120 = vmatpush1.msra.mxu0 0.0
        %1121 = vmatprep.subr.mxu0 0.0
        %1122 = vmatpush1.msra.mxu0 0.0
        %1123 = vmatprep.subr.mxu0 0.0
        %1124 = vmatpush1.msra.mxu0 0.0
        %1125 = vmatprep.subr.mxu0 0.0
        %1126 = vmatpush1.msra.mxu0 0.0
        %1127 = vmatprep.mubr.f32.mxu0 %v1058
        %1128 = vmatmul.mubr.f32.gmra.mrb[0].mxu0 %v1036
        %v1129 = vpop.f32.mrb[0].mxu0
        %v1130 = vadd.f32 0.0, %v1129
        %v1131 = vpop.f32.mrb[0].mxu0
        %1132 = vdwg.mxu0
        %v1133 = vadd.f32 %v1035, %v1130
        %v1134 = vld [vmem:[#allocation2 + $0x60] sm:$0xff]
        %v1135 = vld [vmem:[#allocation2 + $0x68] sm:$0xff]
        %s1136 = scalar_lea.vmem %s3, 864
        %v1137 = vld [vmem:[%s1136] sm:$0xff]
        %v1138 = vld [vmem:[%s1136 + $0x8] sm:$0xff]
        %v1139 = vld [vmem:[%s1136 + $0x10] sm:$0xff]
        %v1140 = vld [vmem:[%s1136 + $0x18] sm:$0xff]
        %v1141 = vld [vmem:[%s1136 + $0x20] sm:$0xff]
        %v1142 = vld [vmem:[%s1136 + $0x28] sm:$0xff]
        %v1143 = vld [vmem:[%s1136 + $0x30] sm:$0xff]
        %v1144 = vld [vmem:[%s1136 + $0x38] sm:$0xff]
        %v1145 = vld [vmem:[%s1136 + $0x40] sm:$0xff]
        %v1146 = vld [vmem:[%s1136 + $0x48] sm:$0xff]
        %v1147 = vld [vmem:[%s1136 + $0x50] sm:$0xff]
        %v1148 = vld [vmem:[%s1136 + $0x58] sm:$0xff]
        %v1149 = vld [vmem:[%s1136 + $0x60] sm:$0xff]
        %v1150 = vld [vmem:[%s1136 + $0x68] sm:$0xff]
        %v1151 = vld [vmem:[%s1136 + $0x70] sm:$0xff]
        %v1152 = vld [vmem:[%s1136 + $0x78] sm:$0xff]
        %v1153 = vld [vmem:[%s1136 + $0x80] sm:$0xff]
        %v1154 = vld [vmem:[%s1136 + $0x88] sm:$0xf]
        %v1156 = vsel %vm520, %v1135, 0
        %v1159 = vsel %vm592, %v1154, 0
        %1161 = vmatprep.subr.mxu0 0.0
        %1162 = vmatpush1.msra.mxu0 %v1137
        %1163 = vmatprep.subr.mxu0 0.0
        %1164 = vmatpush1.msra.mxu0 %v1138
        %1165 = vmatprep.subr.mxu0 0.0
        %1166 = vmatpush1.msra.mxu0 %v1139
        %1167 = vmatprep.subr.mxu0 0.0
        %1168 = vmatpush1.msra.mxu0 %v1140
        %1169 = vmatprep.subr.mxu0 0.0
        %1170 = vmatpush1.msra.mxu0 %v1141
        %1171 = vmatprep.subr.mxu0 0.0
        %1172 = vmatpush1.msra.mxu0 %v1142
        %1173 = vmatprep.subr.mxu0 0.0
        %1174 = vmatpush1.msra.mxu0 %v1143
        %1175 = vmatprep.subr.mxu0 0.0
        %1176 = vmatpush1.msra.mxu0 %v1144
        %1177 = vmatprep.subr.mxu0 0.0
        %1178 = vmatpush1.msra.mxu0 %v1145
        %1179 = vmatprep.subr.mxu0 0.0
        %1180 = vmatpush1.msra.mxu0 %v1146
        %1181 = vmatprep.subr.mxu0 0.0
        %1182 = vmatpush1.msra.mxu0 %v1147
        %1183 = vmatprep.subr.mxu0 0.0
        %1184 = vmatpush1.msra.mxu0 %v1148
        %1185 = vmatprep.subr.mxu0 0.0
        %1186 = vmatpush1.msra.mxu0 %v1149
        %1187 = vmatprep.subr.mxu0 0.0
        %1188 = vmatpush1.msra.mxu0 %v1150
        %1189 = vmatprep.subr.mxu0 0.0
        %1190 = vmatpush1.msra.mxu0 %v1151
        %1191 = vmatprep.subr.mxu0 0.0
        %1192 = vmatpush1.msra.mxu0 %v1152
        %1193 = vmatprep.subr.mxu0 0.0
        %1194 = vmatpush1.msra.mxu0 %v1153
        %1195 = vmatprep.subr.mxu0 0.0
        %1196 = vmatpush1.msra.mxu0 %v1159
        %1197 = vmatprep.subr.mxu0 0.0
        %1198 = vmatpush1.msra.mxu0 0.0
        %1199 = vmatprep.subr.mxu0 0.0
        %1200 = vmatpush1.msra.mxu0 0.0
        %1201 = vmatprep.subr.mxu0 0.0
        %1202 = vmatpush1.msra.mxu0 0.0
        %1203 = vmatprep.subr.mxu0 0.0
        %1204 = vmatpush1.msra.mxu0 0.0
        %1205 = vmatprep.subr.mxu0 0.0
        %1206 = vmatpush1.msra.mxu0 0.0
        %1207 = vmatprep.subr.mxu0 0.0
        %1208 = vmatpush1.msra.mxu0 0.0
        %1209 = vmatprep.subr.mxu0 0.0
        %1210 = vmatpush1.msra.mxu0 0.0
        %1211 = vmatprep.subr.mxu0 0.0
        %1212 = vmatpush1.msra.mxu0 0.0
        %1213 = vmatprep.subr.mxu0 0.0
        %1214 = vmatpush1.msra.mxu0 0.0
        %1215 = vmatprep.subr.mxu0 0.0
        %1216 = vmatpush1.msra.mxu0 0.0
        %1217 = vmatprep.subr.mxu0 0.0
        %1218 = vmatpush1.msra.mxu0 0.0
        %1219 = vmatprep.subr.mxu0 0.0
        %1220 = vmatpush1.msra.mxu0 0.0
        %1221 = vmatprep.subr.mxu0 0.0
        %1222 = vmatpush1.msra.mxu0 0.0
        %1223 = vmatprep.subr.mxu0 0.0
        %1224 = vmatpush1.msra.mxu0 0.0
        %1225 = vmatprep.mubr.f32.mxu0 %v1156
        %1226 = vmatmul.mubr.f32.gmra.mrb[0].mxu0 %v1134
        %v1227 = vpop.f32.mrb[0].mxu0
        %v1228 = vadd.f32 0.0, %v1227
        %v1229 = vpop.f32.mrb[0].mxu0
        %1230 = vdwg.mxu0
        %v1231 = vadd.f32 %v1133, %v1228
        %v1232 = vld [vmem:[#allocation2 + $0x70] sm:$0xff]
        %v1233 = vld [vmem:[#allocation2 + $0x78] sm:$0xff]
        %s1234 = scalar_lea.vmem %s3, 1008
        %v1235 = vld [vmem:[%s1234] sm:$0xff]
        %v1236 = vld [vmem:[%s1234 + $0x8] sm:$0xff]
        %v1237 = vld [vmem:[%s1234 + $0x10] sm:$0xff]
        %v1238 = vld [vmem:[%s1234 + $0x18] sm:$0xff]
        %v1239 = vld [vmem:[%s1234 + $0x20] sm:$0xff]
        %v1240 = vld [vmem:[%s1234 + $0x28] sm:$0xff]
        %v1241 = vld [vmem:[%s1234 + $0x30] sm:$0xff]
        %v1242 = vld [vmem:[%s1234 + $0x38] sm:$0xff]
        %v1243 = vld [vmem:[%s1234 + $0x40] sm:$0xff]
        %v1244 = vld [vmem:[%s1234 + $0x48] sm:$0xff]
        %v1245 = vld [vmem:[%s1234 + $0x50] sm:$0xff]
        %v1246 = vld [vmem:[%s1234 + $0x58] sm:$0xff]
        %v1247 = vld [vmem:[%s1234 + $0x60] sm:$0xff]
        %v1248 = vld [vmem:[%s1234 + $0x68] sm:$0xff]
        %v1249 = vld [vmem:[%s1234 + $0x70] sm:$0xff]
        %v1250 = vld [vmem:[%s1234 + $0x78] sm:$0xff]
        %v1251 = vld [vmem:[%s1234 + $0x80] sm:$0xff]
        %v1252 = vld [vmem:[%s1234 + $0x88] sm:$0xf]
        %v1254 = vsel %vm520, %v1233, 0
        %v1257 = vsel %vm592, %v1252, 0
        %1259 = vmatprep.subr.mxu0 0.0
        %1260 = vmatpush1.msra.mxu0 %v1235
        %1261 = vmatprep.subr.mxu0 0.0
        %1262 = vmatpush1.msra.mxu0 %v1236
        %1263 = vmatprep.subr.mxu0 0.0
        %1264 = vmatpush1.msra.mxu0 %v1237
        %1265 = vmatprep.subr.mxu0 0.0
        %1266 = vmatpush1.msra.mxu0 %v1238
        %1267 = vmatprep.subr.mxu0 0.0
        %1268 = vmatpush1.msra.mxu0 %v1239
        %1269 = vmatprep.subr.mxu0 0.0
        %1270 = vmatpush1.msra.mxu0 %v1240
        %1271 = vmatprep.subr.mxu0 0.0
        %1272 = vmatpush1.msra.mxu0 %v1241
        %1273 = vmatprep.subr.mxu0 0.0
        %1274 = vmatpush1.msra.mxu0 %v1242
        %1275 = vmatprep.subr.mxu0 0.0
        %1276 = vmatpush1.msra.mxu0 %v1243
        %1277 = vmatprep.subr.mxu0 0.0
        %1278 = vmatpush1.msra.mxu0 %v1244
        %1279 = vmatprep.subr.mxu0 0.0
        %1280 = vmatpush1.msra.mxu0 %v1245
        %1281 = vmatprep.subr.mxu0 0.0
        %1282 = vmatpush1.msra.mxu0 %v1246
        %1283 = vmatprep.subr.mxu0 0.0
        %1284 = vmatpush1.msra.mxu0 %v1247
        %1285 = vmatprep.subr.mxu0 0.0
        %1286 = vmatpush1.msra.mxu0 %v1248
        %1287 = vmatprep.subr.mxu0 0.0
        %1288 = vmatpush1.msra.mxu0 %v1249
        %1289 = vmatprep.subr.mxu0 0.0
        %1290 = vmatpush1.msra.mxu0 %v1250
        %1291 = vmatprep.subr.mxu0 0.0
        %1292 = vmatpush1.msra.mxu0 %v1251
        %1293 = vmatprep.subr.mxu0 0.0
        %1294 = vmatpush1.msra.mxu0 %v1257
        %1295 = vmatprep.subr.mxu0 0.0
        %1296 = vmatpush1.msra.mxu0 0.0
        %1297 = vmatprep.subr.mxu0 0.0
        %1298 = vmatpush1.msra.mxu0 0.0
        %1299 = vmatprep.subr.mxu0 0.0
        %1300 = vmatpush1.msra.mxu0 0.0
        %1301 = vmatprep.subr.mxu0 0.0
        %1302 = vmatpush1.msra.mxu0 0.0
        %1303 = vmatprep.subr.mxu0 0.0
        %1304 = vmatpush1.msra.mxu0 0.0
        %1305 = vmatprep.subr.mxu0 0.0
        %1306 = vmatpush1.msra.mxu0 0.0
        %1307 = vmatprep.subr.mxu0 0.0
        %1308 = vmatpush1.msra.mxu0 0.0
        %1309 = vmatprep.subr.mxu0 0.0
        %1310 = vmatpush1.msra.mxu0 0.0
        %1311 = vmatprep.subr.mxu0 0.0
        %1312 = vmatpush1.msra.mxu0 0.0
        %1313 = vmatprep.subr.mxu0 0.0
        %1314 = vmatpush1.msra.mxu0 0.0
        %1315 = vmatprep.subr.mxu0 0.0
        %1316 = vmatpush1.msra.mxu0 0.0
        %1317 = vmatprep.subr.mxu0 0.0
        %1318 = vmatpush1.msra.mxu0 0.0
        %1319 = vmatprep.subr.mxu0 0.0
        %1320 = vmatpush1.msra.mxu0 0.0
        %1321 = vmatprep.subr.mxu0 0.0
        %1322 = vmatpush1.msra.mxu0 0.0
        %1323 = vmatprep.mubr.f32.mxu0 %v1254
        %1324 = vmatmul.mubr.f32.gmra.mrb[0].mxu0 %v1232
        %v1325 = vpop.f32.mrb[0].mxu0
        %v1326 = vadd.f32 0.0, %v1325
        %v1327 = vpop.f32.mrb[0].mxu0
        %1328 = vdwg.mxu0
        %v1329 = vadd.f32 %v1231, %v1326
        %v1330 = vld [vmem:[#allocation2 + $0x80] sm:$0xff]
        %v1331 = vld [vmem:[#allocation2 + $0x88] sm:$0xff]
        %s1332 = scalar_lea.vmem %s3, 1152
        %v1333 = vld [vmem:[%s1332] sm:$0xff]
        %v1334 = vld [vmem:[%s1332 + $0x8] sm:$0xff]
        %v1335 = vld [vmem:[%s1332 + $0x10] sm:$0xff]
        %v1336 = vld [vmem:[%s1332 + $0x18] sm:$0xff]
        %v1337 = vld [vmem:[%s1332 + $0x20] sm:$0xff]
        %v1338 = vld [vmem:[%s1332 + $0x28] sm:$0xff]
        %v1339 = vld [vmem:[%s1332 + $0x30] sm:$0xff]
        %v1340 = vld [vmem:[%s1332 + $0x38] sm:$0xff]
        %v1341 = vld [vmem:[%s1332 + $0x40] sm:$0xff]
        %v1342 = vld [vmem:[%s1332 + $0x48] sm:$0xff]
        %v1343 = vld [vmem:[%s1332 + $0x50] sm:$0xff]
        %v1344 = vld [vmem:[%s1332 + $0x58] sm:$0xff]
        %v1345 = vld [vmem:[%s1332 + $0x60] sm:$0xff]
        %v1346 = vld [vmem:[%s1332 + $0x68] sm:$0xff]
        %v1347 = vld [vmem:[%s1332 + $0x70] sm:$0xff]
        %v1348 = vld [vmem:[%s1332 + $0x78] sm:$0xff]
        %v1349 = vld [vmem:[%s1332 + $0x80] sm:$0xff]
        %v1350 = vld [vmem:[%s1332 + $0x88] sm:$0xf]
        %v1352 = vsel %vm520, %v1331, 0
        %v1355 = vsel %vm592, %v1350, 0
        %1357 = vmatprep.subr.mxu0 0.0
        %1358 = vmatpush1.msra.mxu0 %v1333
        %1359 = vmatprep.subr.mxu0 0.0
        %1360 = vmatpush1.msra.mxu0 %v1334
        %1361 = vmatprep.subr.mxu0 0.0
        %1362 = vmatpush1.msra.mxu0 %v1335
        %1363 = vmatprep.subr.mxu0 0.0
        %1364 = vmatpush1.msra.mxu0 %v1336
        %1365 = vmatprep.subr.mxu0 0.0
        %1366 = vmatpush1.msra.mxu0 %v1337
        %1367 = vmatprep.subr.mxu0 0.0
        %1368 = vmatpush1.msra.mxu0 %v1338
        %1369 = vmatprep.subr.mxu0 0.0
        %1370 = vmatpush1.msra.mxu0 %v1339
        %1371 = vmatprep.subr.mxu0 0.0
        %1372 = vmatpush1.msra.mxu0 %v1340
        %1373 = vmatprep.subr.mxu0 0.0
        %1374 = vmatpush1.msra.mxu0 %v1341
        %1375 = vmatprep.subr.mxu0 0.0
        %1376 = vmatpush1.msra.mxu0 %v1342
        %1377 = vmatprep.subr.mxu0 0.0
        %1378 = vmatpush1.msra.mxu0 %v1343
        %1379 = vmatprep.subr.mxu0 0.0
        %1380 = vmatpush1.msra.mxu0 %v1344
        %1381 = vmatprep.subr.mxu0 0.0
        %1382 = vmatpush1.msra.mxu0 %v1345
        %1383 = vmatprep.subr.mxu0 0.0
        %1384 = vmatpush1.msra.mxu0 %v1346
        %1385 = vmatprep.subr.mxu0 0.0
        %1386 = vmatpush1.msra.mxu0 %v1347
        %1387 = vmatprep.subr.mxu0 0.0
        %1388 = vmatpush1.msra.mxu0 %v1348
        %1389 = vmatprep.subr.mxu0 0.0
        %1390 = vmatpush1.msra.mxu0 %v1349
        %1391 = vmatprep.subr.mxu0 0.0
        %1392 = vmatpush1.msra.mxu0 %v1355
        %1393 = vmatprep.subr.mxu0 0.0
        %1394 = vmatpush1.msra.mxu0 0.0
        %1395 = vmatprep.subr.mxu0 0.0
        %1396 = vmatpush1.msra.mxu0 0.0
        %1397 = vmatprep.subr.mxu0 0.0
        %1398 = vmatpush1.msra.mxu0 0.0
        %1399 = vmatprep.subr.mxu0 0.0
        %1400 = vmatpush1.msra.mxu0 0.0
        %1401 = vmatprep.subr.mxu0 0.0
        %1402 = vmatpush1.msra.mxu0 0.0
        %1403 = vmatprep.subr.mxu0 0.0
        %1404 = vmatpush1.msra.mxu0 0.0
        %1405 = vmatprep.subr.mxu0 0.0
        %1406 = vmatpush1.msra.mxu0 0.0
        %1407 = vmatprep.subr.mxu0 0.0
        %1408 = vmatpush1.msra.mxu0 0.0
        %1409 = vmatprep.subr.mxu0 0.0
        %1410 = vmatpush1.msra.mxu0 0.0
        %1411 = vmatprep.subr.mxu0 0.0
        %1412 = vmatpush1.msra.mxu0 0.0
        %1413 = vmatprep.subr.mxu0 0.0
        %1414 = vmatpush1.msra.mxu0 0.0
        %1415 = vmatprep.subr.mxu0 0.0
        %1416 = vmatpush1.msra.mxu0 0.0
        %1417 = vmatprep.subr.mxu0 0.0
        %1418 = vmatpush1.msra.mxu0 0.0
        %1419 = vmatprep.subr.mxu0 0.0
        %1420 = vmatpush1.msra.mxu0 0.0
        %1421 = vmatprep.mubr.f32.mxu0 %v1352
        %1422 = vmatmul.mubr.f32.gmra.mrb[0].mxu0 %v1330
        %v1423 = vpop.f32.mrb[0].mxu0
        %v1424 = vadd.f32 0.0, %v1423
        %v1425 = vpop.f32.mrb[0].mxu0
        %1426 = vdwg.mxu0
        %v1427 = vadd.f32 %v1329, %v1424
        %v1428 = vld [vmem:[#allocation2 + $0x90] sm:$0xff]
        %v1429 = vld [vmem:[#allocation2 + $0x98] sm:$0xff]
        %s1430 = scalar_lea.vmem %s3, 1296
        %v1431 = vld [vmem:[%s1430] sm:$0xff]
        %v1432 = vld [vmem:[%s1430 + $0x8] sm:$0xff]
        %v1433 = vld [vmem:[%s1430 + $0x10] sm:$0xff]
        %v1434 = vld [vmem:[%s1430 + $0x18] sm:$0xff]
        %v1435 = vld [vmem:[%s1430 + $0x20] sm:$0xff]
        %v1436 = vld [vmem:[%s1430 + $0x28] sm:$0xff]
        %v1437 = vld [vmem:[%s1430 + $0x30] sm:$0xff]
        %v1438 = vld [vmem:[%s1430 + $0x38] sm:$0xff]
        %v1439 = vld [vmem:[%s1430 + $0x40] sm:$0xff]
        %v1440 = vld [vmem:[%s1430 + $0x48] sm:$0xff]
        %v1441 = vld [vmem:[%s1430 + $0x50] sm:$0xff]
        %v1442 = vld [vmem:[%s1430 + $0x58] sm:$0xff]
        %v1443 = vld [vmem:[%s1430 + $0x60] sm:$0xff]
        %v1444 = vld [vmem:[%s1430 + $0x68] sm:$0xff]
        %v1445 = vld [vmem:[%s1430 + $0x70] sm:$0xff]
        %v1446 = vld [vmem:[%s1430 + $0x78] sm:$0xff]
        %v1447 = vld [vmem:[%s1430 + $0x80] sm:$0xff]
        %v1448 = vld [vmem:[%s1430 + $0x88] sm:$0xf]
        %v1450 = vsel %vm520, %v1429, 0
        %v1453 = vsel %vm592, %v1448, 0
        %1455 = vmatprep.subr.mxu0 0.0
        %1456 = vmatpush1.msra.mxu0 %v1431
        %1457 = vmatprep.subr.mxu0 0.0
        %1458 = vmatpush1.msra.mxu0 %v1432
        %1459 = vmatprep.subr.mxu0 0.0
        %1460 = vmatpush1.msra.mxu0 %v1433
        %1461 = vmatprep.subr.mxu0 0.0
        %1462 = vmatpush1.msra.mxu0 %v1434
        %1463 = vmatprep.subr.mxu0 0.0
        %1464 = vmatpush1.msra.mxu0 %v1435
        %1465 = vmatprep.subr.mxu0 0.0
        %1466 = vmatpush1.msra.mxu0 %v1436
        %1467 = vmatprep.subr.mxu0 0.0
        %1468 = vmatpush1.msra.mxu0 %v1437
        %1469 = vmatprep.subr.mxu0 0.0
        %1470 = vmatpush1.msra.mxu0 %v1438
        %1471 = vmatprep.subr.mxu0 0.0
        %1472 = vmatpush1.msra.mxu0 %v1439
        %1473 = vmatprep.subr.mxu0 0.0
        %1474 = vmatpush1.msra.mxu0 %v1440
        %1475 = vmatprep.subr.mxu0 0.0
        %1476 = vmatpush1.msra.mxu0 %v1441
        %1477 = vmatprep.subr.mxu0 0.0
        %1478 = vmatpush1.msra.mxu0 %v1442
        %1479 = vmatprep.subr.mxu0 0.0
        %1480 = vmatpush1.msra.mxu0 %v1443
        %1481 = vmatprep.subr.mxu0 0.0
        %1482 = vmatpush1.msra.mxu0 %v1444
        %1483 = vmatprep.subr.mxu0 0.0
        %1484 = vmatpush1.msra.mxu0 %v1445
        %1485 = vmatprep.subr.mxu0 0.0
        %1486 = vmatpush1.msra.mxu0 %v1446
        %1487 = vmatprep.subr.mxu0 0.0
        %1488 = vmatpush1.msra.mxu0 %v1447
        %1489 = vmatprep.subr.mxu0 0.0
        %1490 = vmatpush1.msra.mxu0 %v1453
        %1491 = vmatprep.subr.mxu0 0.0
        %1492 = vmatpush1.msra.mxu0 0.0
        %1493 = vmatprep.subr.mxu0 0.0
        %1494 = vmatpush1.msra.mxu0 0.0
        %1495 = vmatprep.subr.mxu0 0.0
        %1496 = vmatpush1.msra.mxu0 0.0
        %1497 = vmatprep.subr.mxu0 0.0
        %1498 = vmatpush1.msra.mxu0 0.0
        %1499 = vmatprep.subr.mxu0 0.0
        %1500 = vmatpush1.msra.mxu0 0.0
        %1501 = vmatprep.subr.mxu0 0.0
        %1502 = vmatpush1.msra.mxu0 0.0
        %1503 = vmatprep.subr.mxu0 0.0
        %1504 = vmatpush1.msra.mxu0 0.0
        %1505 = vmatprep.subr.mxu0 0.0
        %1506 = vmatpush1.msra.mxu0 0.0
        %1507 = vmatprep.subr.mxu0 0.0
        %1508 = vmatpush1.msra.mxu0 0.0
        %1509 = vmatprep.subr.mxu0 0.0
        %1510 = vmatpush1.msra.mxu0 0.0
        %1511 = vmatprep.subr.mxu0 0.0
        %1512 = vmatpush1.msra.mxu0 0.0
        %1513 = vmatprep.subr.mxu0 0.0
        %1514 = vmatpush1.msra.mxu0 0.0
        %1515 = vmatprep.subr.mxu0 0.0
        %1516 = vmatpush1.msra.mxu0 0.0
        %1517 = vmatprep.subr.mxu0 0.0
        %1518 = vmatpush1.msra.mxu0 0.0
        %1519 = vmatprep.mubr.f32.mxu0 %v1450
        %1520 = vmatmul.mubr.f32.gmra.mrb[0].mxu0 %v1428
        %v1521 = vpop.f32.mrb[0].mxu0
        %v1522 = vadd.f32 0.0, %v1521
        %v1523 = vpop.f32.mrb[0].mxu0
        %1524 = vdwg.mxu0
        %v1525 = vadd.f32 %v1427, %v1522
        %v1526 = vld [vmem:[#allocation2 + $0xa0] sm:$0xff]
        %v1527 = vld [vmem:[#allocation2 + $0xa8] sm:$0xff]
        %s1528 = scalar_lea.vmem %s3, 1440
        %v1529 = vld [vmem:[%s1528] sm:$0xff]
        %v1530 = vld [vmem:[%s1528 + $0x8] sm:$0xff]
        %v1531 = vld [vmem:[%s1528 + $0x10] sm:$0xff]
        %v1532 = vld [vmem:[%s1528 + $0x18] sm:$0xff]
        %v1533 = vld [vmem:[%s1528 + $0x20] sm:$0xff]
        %v1534 = vld [vmem:[%s1528 + $0x28] sm:$0xff]
        %v1535 = vld [vmem:[%s1528 + $0x30] sm:$0xff]
        %v1536 = vld [vmem:[%s1528 + $0x38] sm:$0xff]
        %v1537 = vld [vmem:[%s1528 + $0x40] sm:$0xff]
        %v1538 = vld [vmem:[%s1528 + $0x48] sm:$0xff]
        %v1539 = vld [vmem:[%s1528 + $0x50] sm:$0xff]
        %v1540 = vld [vmem:[%s1528 + $0x58] sm:$0xff]
        %v1541 = vld [vmem:[%s1528 + $0x60] sm:$0xff]
        %v1542 = vld [vmem:[%s1528 + $0x68] sm:$0xff]
        %v1543 = vld [vmem:[%s1528 + $0x70] sm:$0xff]
        %v1544 = vld [vmem:[%s1528 + $0x78] sm:$0xff]
        %v1545 = vld [vmem:[%s1528 + $0x80] sm:$0xff]
        %v1546 = vld [vmem:[%s1528 + $0x88] sm:$0xf]
        %v1548 = vsel %vm520, %v1527, 0
        %v1551 = vsel %vm592, %v1546, 0
        %1553 = vmatprep.subr.mxu0 0.0
        %1554 = vmatpush1.msra.mxu0 %v1529
        %1555 = vmatprep.subr.mxu0 0.0
        %1556 = vmatpush1.msra.mxu0 %v1530
        %1557 = vmatprep.subr.mxu0 0.0
        %1558 = vmatpush1.msra.mxu0 %v1531
        %1559 = vmatprep.subr.mxu0 0.0
        %1560 = vmatpush1.msra.mxu0 %v1532
        %1561 = vmatprep.subr.mxu0 0.0
        %1562 = vmatpush1.msra.mxu0 %v1533
        %1563 = vmatprep.subr.mxu0 0.0
        %1564 = vmatpush1.msra.mxu0 %v1534
        %1565 = vmatprep.subr.mxu0 0.0
        %1566 = vmatpush1.msra.mxu0 %v1535
        %1567 = vmatprep.subr.mxu0 0.0
        %1568 = vmatpush1.msra.mxu0 %v1536
        %1569 = vmatprep.subr.mxu0 0.0
        %1570 = vmatpush1.msra.mxu0 %v1537
        %1571 = vmatprep.subr.mxu0 0.0
        %1572 = vmatpush1.msra.mxu0 %v1538
        %1573 = vmatprep.subr.mxu0 0.0
        %1574 = vmatpush1.msra.mxu0 %v1539
        %1575 = vmatprep.subr.mxu0 0.0
        %1576 = vmatpush1.msra.mxu0 %v1540
        %1577 = vmatprep.subr.mxu0 0.0
        %1578 = vmatpush1.msra.mxu0 %v1541
        %1579 = vmatprep.subr.mxu0 0.0
        %1580 = vmatpush1.msra.mxu0 %v1542
        %1581 = vmatprep.subr.mxu0 0.0
        %1582 = vmatpush1.msra.mxu0 %v1543
        %1583 = vmatprep.subr.mxu0 0.0
        %1584 = vmatpush1.msra.mxu0 %v1544
        %1585 = vmatprep.subr.mxu0 0.0
        %1586 = vmatpush1.msra.mxu0 %v1545
        %1587 = vmatprep.subr.mxu0 0.0
        %1588 = vmatpush1.msra.mxu0 %v1551
        %1589 = vmatprep.subr.mxu0 0.0
        %1590 = vmatpush1.msra.mxu0 0.0
        %1591 = vmatprep.subr.mxu0 0.0
        %1592 = vmatpush1.msra.mxu0 0.0
        %1593 = vmatprep.subr.mxu0 0.0
        %1594 = vmatpush1.msra.mxu0 0.0
        %1595 = vmatprep.subr.mxu0 0.0
        %1596 = vmatpush1.msra.mxu0 0.0
        %1597 = vmatprep.subr.mxu0 0.0
        %1598 = vmatpush1.msra.mxu0 0.0
        %1599 = vmatprep.subr.mxu0 0.0
        %1600 = vmatpush1.msra.mxu0 0.0
        %1601 = vmatprep.subr.mxu0 0.0
        %1602 = vmatpush1.msra.mxu0 0.0
        %1603 = vmatprep.subr.mxu0 0.0
        %1604 = vmatpush1.msra.mxu0 0.0
        %1605 = vmatprep.subr.mxu0 0.0
        %1606 = vmatpush1.msra.mxu0 0.0
        %1607 = vmatprep.subr.mxu0 0.0
        %1608 = vmatpush1.msra.mxu0 0.0
        %1609 = vmatprep.subr.mxu0 0.0
        %1610 = vmatpush1.msra.mxu0 0.0
        %1611 = vmatprep.subr.mxu0 0.0
        %1612 = vmatpush1.msra.mxu0 0.0
        %1613 = vmatprep.subr.mxu0 0.0
        %1614 = vmatpush1.msra.mxu0 0.0
        %1615 = vmatprep.subr.mxu0 0.0
        %1616 = vmatpush1.msra.mxu0 0.0
        %1617 = vmatprep.mubr.f32.mxu0 %v1548
        %1618 = vmatmul.mubr.f32.gmra.mrb[0].mxu0 %v1526
        %v1619 = vpop.f32.mrb[0].mxu0
        %v1620 = vadd.f32 0.0, %v1619
        %v1621 = vpop.f32.mrb[0].mxu0
        %1622 = vdwg.mxu0
        %v1623 = vadd.f32 %v1525, %v1620
        %v1624 = vld [vmem:[#allocation2 + $0xb0] sm:$0xff]
        %v1625 = vld [vmem:[#allocation2 + $0xb8] sm:$0xff]
        %s1626 = scalar_lea.vmem %s3, 1584
        %v1627 = vld [vmem:[%s1626] sm:$0xff]
        %v1628 = vld [vmem:[%s1626 + $0x8] sm:$0xff]
        %v1629 = vld [vmem:[%s1626 + $0x10] sm:$0xff]
        %v1630 = vld [vmem:[%s1626 + $0x18] sm:$0xff]
        %v1631 = vld [vmem:[%s1626 + $0x20] sm:$0xff]
        %v1632 = vld [vmem:[%s1626 + $0x28] sm:$0xff]
        %v1633 = vld [vmem:[%s1626 + $0x30] sm:$0xff]
        %v1634 = vld [vmem:[%s1626 + $0x38] sm:$0xff]
        %v1635 = vld [vmem:[%s1626 + $0x40] sm:$0xff]
        %v1636 = vld [vmem:[%s1626 + $0x48] sm:$0xff]
        %v1637 = vld [vmem:[%s1626 + $0x50] sm:$0xff]
        %v1638 = vld [vmem:[%s1626 + $0x58] sm:$0xff]
        %v1639 = vld [vmem:[%s1626 + $0x60] sm:$0xff]
        %v1640 = vld [vmem:[%s1626 + $0x68] sm:$0xff]
        %v1641 = vld [vmem:[%s1626 + $0x70] sm:$0xff]
        %v1642 = vld [vmem:[%s1626 + $0x78] sm:$0xff]
        %v1643 = vld [vmem:[%s1626 + $0x80] sm:$0xff]
        %v1644 = vld [vmem:[%s1626 + $0x88] sm:$0xf]
        %v1646 = vsel %vm520, %v1625, 0
        %v1649 = vsel %vm592, %v1644, 0
        %1651 = vmatprep.subr.mxu0 0.0
        %1652 = vmatpush1.msra.mxu0 %v1627
        %1653 = vmatprep.subr.mxu0 0.0
        %1654 = vmatpush1.msra.mxu0 %v1628
        %1655 = vmatprep.subr.mxu0 0.0
        %1656 = vmatpush1.msra.mxu0 %v1629
        %1657 = vmatprep.subr.mxu0 0.0
        %1658 = vmatpush1.msra.mxu0 %v1630
        %1659 = vmatprep.subr.mxu0 0.0
        %1660 = vmatpush1.msra.mxu0 %v1631
        %1661 = vmatprep.subr.mxu0 0.0
        %1662 = vmatpush1.msra.mxu0 %v1632
        %1663 = vmatprep.subr.mxu0 0.0
        %1664 = vmatpush1.msra.mxu0 %v1633
        %1665 = vmatprep.subr.mxu0 0.0
        %1666 = vmatpush1.msra.mxu0 %v1634
        %1667 = vmatprep.subr.mxu0 0.0
        %1668 = vmatpush1.msra.mxu0 %v1635
        %1669 = vmatprep.subr.mxu0 0.0
        %1670 = vmatpush1.msra.mxu0 %v1636
        %1671 = vmatprep.subr.mxu0 0.0
        %1672 = vmatpush1.msra.mxu0 %v1637
        %1673 = vmatprep.subr.mxu0 0.0
        %1674 = vmatpush1.msra.mxu0 %v1638
        %1675 = vmatprep.subr.mxu0 0.0
        %1676 = vmatpush1.msra.mxu0 %v1639
        %1677 = vmatprep.subr.mxu0 0.0
        %1678 = vmatpush1.msra.mxu0 %v1640
        %1679 = vmatprep.subr.mxu0 0.0
        %1680 = vmatpush1.msra.mxu0 %v1641
        %1681 = vmatprep.subr.mxu0 0.0
        %1682 = vmatpush1.msra.mxu0 %v1642
        %1683 = vmatprep.subr.mxu0 0.0
        %1684 = vmatpush1.msra.mxu0 %v1643
        %1685 = vmatprep.subr.mxu0 0.0
        %1686 = vmatpush1.msra.mxu0 %v1649
        %1687 = vmatprep.subr.mxu0 0.0
        %1688 = vmatpush1.msra.mxu0 0.0
        %1689 = vmatprep.subr.mxu0 0.0
        %1690 = vmatpush1.msra.mxu0 0.0
        %1691 = vmatprep.subr.mxu0 0.0
        %1692 = vmatpush1.msra.mxu0 0.0
        %1693 = vmatprep.subr.mxu0 0.0
        %1694 = vmatpush1.msra.mxu0 0.0
        %1695 = vmatprep.subr.mxu0 0.0
        %1696 = vmatpush1.msra.mxu0 0.0
        %1697 = vmatprep.subr.mxu0 0.0
        %1698 = vmatpush1.msra.mxu0 0.0
        %1699 = vmatprep.subr.mxu0 0.0
        %1700 = vmatpush1.msra.mxu0 0.0
        %1701 = vmatprep.subr.mxu0 0.0
        %1702 = vmatpush1.msra.mxu0 0.0
        %1703 = vmatprep.subr.mxu0 0.0
        %1704 = vmatpush1.msra.mxu0 0.0
        %1705 = vmatprep.subr.mxu0 0.0
        %1706 = vmatpush1.msra.mxu0 0.0
        %1707 = vmatprep.subr.mxu0 0.0
        %1708 = vmatpush1.msra.mxu0 0.0
        %1709 = vmatprep.subr.mxu0 0.0
        %1710 = vmatpush1.msra.mxu0 0.0
        %1711 = vmatprep.subr.mxu0 0.0
        %1712 = vmatpush1.msra.mxu0 0.0
        %1713 = vmatprep.subr.mxu0 0.0
        %1714 = vmatpush1.msra.mxu0 0.0
        %1715 = vmatprep.mubr.f32.mxu0 %v1646
        %1716 = vmatmul.mubr.f32.gmra.mrb[0].mxu0 %v1624
        %v1717 = vpop.f32.mrb[0].mxu0
        %v1718 = vadd.f32 0.0, %v1717
        %v1719 = vpop.f32.mrb[0].mxu0
        %1720 = vdwg.mxu0
        %v1721 = vadd.f32 %v1623, %v1718
        %v1722 = vld [vmem:[#allocation2 + $0xc0] sm:$0xff]
        %v1723 = vld [vmem:[#allocation2 + $0xc8] sm:$0xff]
        %s1724 = scalar_lea.vmem %s3, 1728
        %v1725 = vld [vmem:[%s1724] sm:$0xff]
        %v1726 = vld [vmem:[%s1724 + $0x8] sm:$0xff]
        %v1727 = vld [vmem:[%s1724 + $0x10] sm:$0xff]
        %v1728 = vld [vmem:[%s1724 + $0x18] sm:$0xff]
        %v1729 = vld [vmem:[%s1724 + $0x20] sm:$0xff]
        %v1730 = vld [vmem:[%s1724 + $0x28] sm:$0xff]
        %v1731 = vld [vmem:[%s1724 + $0x30] sm:$0xff]
        %v1732 = vld [vmem:[%s1724 + $0x38] sm:$0xff]
        %v1733 = vld [vmem:[%s1724 + $0x40] sm:$0xff]
        %v1734 = vld [vmem:[%s1724 + $0x48] sm:$0xff]
        %v1735 = vld [vmem:[%s1724 + $0x50] sm:$0xff]
        %v1736 = vld [vmem:[%s1724 + $0x58] sm:$0xff]
        %v1737 = vld [vmem:[%s1724 + $0x60] sm:$0xff]
        %v1738 = vld [vmem:[%s1724 + $0x68] sm:$0xff]
        %v1739 = vld [vmem:[%s1724 + $0x70] sm:$0xff]
        %v1740 = vld [vmem:[%s1724 + $0x78] sm:$0xff]
        %v1741 = vld [vmem:[%s1724 + $0x80] sm:$0xff]
        %v1742 = vld [vmem:[%s1724 + $0x88] sm:$0xf]
        %v1744 = vsel %vm520, %v1723, 0
        %v1747 = vsel %vm592, %v1742, 0
        %1749 = vmatprep.subr.mxu0 0.0
        %1750 = vmatpush1.msra.mxu0 %v1725
        %1751 = vmatprep.subr.mxu0 0.0
        %1752 = vmatpush1.msra.mxu0 %v1726
        %1753 = vmatprep.subr.mxu0 0.0
        %1754 = vmatpush1.msra.mxu0 %v1727
        %1755 = vmatprep.subr.mxu0 0.0
        %1756 = vmatpush1.msra.mxu0 %v1728
        %1757 = vmatprep.subr.mxu0 0.0
        %1758 = vmatpush1.msra.mxu0 %v1729
        %1759 = vmatprep.subr.mxu0 0.0
        %1760 = vmatpush1.msra.mxu0 %v1730
        %1761 = vmatprep.subr.mxu0 0.0
        %1762 = vmatpush1.msra.mxu0 %v1731
        %1763 = vmatprep.subr.mxu0 0.0
        %1764 = vmatpush1.msra.mxu0 %v1732
        %1765 = vmatprep.subr.mxu0 0.0
        %1766 = vmatpush1.msra.mxu0 %v1733
        %1767 = vmatprep.subr.mxu0 0.0
        %1768 = vmatpush1.msra.mxu0 %v1734
        %1769 = vmatprep.subr.mxu0 0.0
        %1770 = vmatpush1.msra.mxu0 %v1735
        %1771 = vmatprep.subr.mxu0 0.0
        %1772 = vmatpush1.msra.mxu0 %v1736
        %1773 = vmatprep.subr.mxu0 0.0
        %1774 = vmatpush1.msra.mxu0 %v1737
        %1775 = vmatprep.subr.mxu0 0.0
        %1776 = vmatpush1.msra.mxu0 %v1738
        %1777 = vmatprep.subr.mxu0 0.0
        %1778 = vmatpush1.msra.mxu0 %v1739
        %1779 = vmatprep.subr.mxu0 0.0
        %1780 = vmatpush1.msra.mxu0 %v1740
        %1781 = vmatprep.subr.mxu0 0.0
        %1782 = vmatpush1.msra.mxu0 %v1741
        %1783 = vmatprep.subr.mxu0 0.0
        %1784 = vmatpush1.msra.mxu0 %v1747
        %1785 = vmatprep.subr.mxu0 0.0
        %1786 = vmatpush1.msra.mxu0 0.0
        %1787 = vmatprep.subr.mxu0 0.0
        %1788 = vmatpush1.msra.mxu0 0.0
        %1789 = vmatprep.subr.mxu0 0.0
        %1790 = vmatpush1.msra.mxu0 0.0
        %1791 = vmatprep.subr.mxu0 0.0
        %1792 = vmatpush1.msra.mxu0 0.0
        %1793 = vmatprep.subr.mxu0 0.0
        %1794 = vmatpush1.msra.mxu0 0.0
        %1795 = vmatprep.subr.mxu0 0.0
        %1796 = vmatpush1.msra.mxu0 0.0
        %1797 = vmatprep.subr.mxu0 0.0
        %1798 = vmatpush1.msra.mxu0 0.0
        %1799 = vmatprep.subr.mxu0 0.0
        %1800 = vmatpush1.msra.mxu0 0.0
        %1801 = vmatprep.subr.mxu0 0.0
        %1802 = vmatpush1.msra.mxu0 0.0
        %1803 = vmatprep.subr.mxu0 0.0
        %1804 = vmatpush1.msra.mxu0 0.0
        %1805 = vmatprep.subr.mxu0 0.0
        %1806 = vmatpush1.msra.mxu0 0.0
        %1807 = vmatprep.subr.mxu0 0.0
        %1808 = vmatpush1.msra.mxu0 0.0
        %1809 = vmatprep.subr.mxu0 0.0
        %1810 = vmatpush1.msra.mxu0 0.0
        %1811 = vmatprep.subr.mxu0 0.0
        %1812 = vmatpush1.msra.mxu0 0.0
        %1813 = vmatprep.mubr.f32.mxu0 %v1744
        %1814 = vmatmul.mubr.f32.gmra.mrb[0].mxu0 %v1722
        %v1815 = vpop.f32.mrb[0].mxu0
        %v1816 = vadd.f32 0.0, %v1815
        %v1817 = vpop.f32.mrb[0].mxu0
        %1818 = vdwg.mxu0
        %v1819 = vadd.f32 %v1721, %v1816
        %v1820 = vld [vmem:[#allocation2 + $0xd0] sm:$0xff]
        %v1821 = vld [vmem:[#allocation2 + $0xd8] sm:$0xff]
        %s1822 = scalar_lea.vmem %s3, 1872
        %v1823 = vld [vmem:[%s1822] sm:$0xff]
        %v1824 = vld [vmem:[%s1822 + $0x8] sm:$0xff]
        %v1825 = vld [vmem:[%s1822 + $0x10] sm:$0xff]
        %v1826 = vld [vmem:[%s1822 + $0x18] sm:$0xff]
        %v1827 = vld [vmem:[%s1822 + $0x20] sm:$0xff]
        %v1828 = vld [vmem:[%s1822 + $0x28] sm:$0xff]
        %v1829 = vld [vmem:[%s1822 + $0x30] sm:$0xff]
        %v1830 = vld [vmem:[%s1822 + $0x38] sm:$0xff]
        %v1831 = vld [vmem:[%s1822 + $0x40] sm:$0xff]
        %v1832 = vld [vmem:[%s1822 + $0x48] sm:$0xff]
        %v1833 = vld [vmem:[%s1822 + $0x50] sm:$0xff]
        %v1834 = vld [vmem:[%s1822 + $0x58] sm:$0xff]
        %v1835 = vld [vmem:[%s1822 + $0x60] sm:$0xff]
        %v1836 = vld [vmem:[%s1822 + $0x68] sm:$0xff]
        %v1837 = vld [vmem:[%s1822 + $0x70] sm:$0xff]
        %v1838 = vld [vmem:[%s1822 + $0x78] sm:$0xff]
        %v1839 = vld [vmem:[%s1822 + $0x80] sm:$0xff]
        %v1840 = vld [vmem:[%s1822 + $0x88] sm:$0xf]
        %v1842 = vsel %vm520, %v1821, 0
        %v1845 = vsel %vm592, %v1840, 0
        %1847 = vmatprep.subr.mxu0 0.0
        %1848 = vmatpush1.msra.mxu0 %v1823
        %1849 = vmatprep.subr.mxu0 0.0
        %1850 = vmatpush1.msra.mxu0 %v1824
        %1851 = vmatprep.subr.mxu0 0.0
        %1852 = vmatpush1.msra.mxu0 %v1825
        %1853 = vmatprep.subr.mxu0 0.0
        %1854 = vmatpush1.msra.mxu0 %v1826
        %1855 = vmatprep.subr.mxu0 0.0
        %1856 = vmatpush1.msra.mxu0 %v1827
        %1857 = vmatprep.subr.mxu0 0.0
        %1858 = vmatpush1.msra.mxu0 %v1828
        %1859 = vmatprep.subr.mxu0 0.0
        %1860 = vmatpush1.msra.mxu0 %v1829
        %1861 = vmatprep.subr.mxu0 0.0
        %1862 = vmatpush1.msra.mxu0 %v1830
        %1863 = vmatprep.subr.mxu0 0.0
        %1864 = vmatpush1.msra.mxu0 %v1831
        %1865 = vmatprep.subr.mxu0 0.0
        %1866 = vmatpush1.msra.mxu0 %v1832
        %1867 = vmatprep.subr.mxu0 0.0
        %1868 = vmatpush1.msra.mxu0 %v1833
        %1869 = vmatprep.subr.mxu0 0.0
        %1870 = vmatpush1.msra.mxu0 %v1834
        %1871 = vmatprep.subr.mxu0 0.0
        %1872 = vmatpush1.msra.mxu0 %v1835
        %1873 = vmatprep.subr.mxu0 0.0
        %1874 = vmatpush1.msra.mxu0 %v1836
        %1875 = vmatprep.subr.mxu0 0.0
        %1876 = vmatpush1.msra.mxu0 %v1837
        %1877 = vmatprep.subr.mxu0 0.0
        %1878 = vmatpush1.msra.mxu0 %v1838
        %1879 = vmatprep.subr.mxu0 0.0
        %1880 = vmatpush1.msra.mxu0 %v1839
        %1881 = vmatprep.subr.mxu0 0.0
        %1882 = vmatpush1.msra.mxu0 %v1845
        %1883 = vmatprep.subr.mxu0 0.0
        %1884 = vmatpush1.msra.mxu0 0.0
        %1885 = vmatprep.subr.mxu0 0.0
        %1886 = vmatpush1.msra.mxu0 0.0
        %1887 = vmatprep.subr.mxu0 0.0
        %1888 = vmatpush1.msra.mxu0 0.0
        %1889 = vmatprep.subr.mxu0 0.0
        %1890 = vmatpush1.msra.mxu0 0.0
        %1891 = vmatprep.subr.mxu0 0.0
        %1892 = vmatpush1.msra.mxu0 0.0
        %1893 = vmatprep.subr.mxu0 0.0
        %1894 = vmatpush1.msra.mxu0 0.0
        %1895 = vmatprep.subr.mxu0 0.0
        %1896 = vmatpush1.msra.mxu0 0.0
        %1897 = vmatprep.subr.mxu0 0.0
        %1898 = vmatpush1.msra.mxu0 0.0
        %1899 = vmatprep.subr.mxu0 0.0
        %1900 = vmatpush1.msra.mxu0 0.0
        %1901 = vmatprep.subr.mxu0 0.0
        %1902 = vmatpush1.msra.mxu0 0.0
        %1903 = vmatprep.subr.mxu0 0.0
        %1904 = vmatpush1.msra.mxu0 0.0
        %1905 = vmatprep.subr.mxu0 0.0
        %1906 = vmatpush1.msra.mxu0 0.0
        %1907 = vmatprep.subr.mxu0 0.0
        %1908 = vmatpush1.msra.mxu0 0.0
        %1909 = vmatprep.subr.mxu0 0.0
        %1910 = vmatpush1.msra.mxu0 0.0
        %1911 = vmatprep.mubr.f32.mxu0 %v1842
        %1912 = vmatmul.mubr.f32.gmra.mrb[0].mxu0 %v1820
        %v1913 = vpop.f32.mrb[0].mxu0
        %v1914 = vadd.f32 0.0, %v1913
        %v1915 = vpop.f32.mrb[0].mxu0
        %1916 = vdwg.mxu0
        %v1917 = vadd.f32 %v1819, %v1914
        %v1918 = vld [vmem:[%s4] sm:$0x1]
        %v1920 = vlaneseq
        %v1921 = vshrl.u32 %v1920, 7
        %v1922 = vsub.s32 0, %v1921
        %v1923 = vrot.slane %v1918, %v1922
        %v1925 = vadd.f32 %v1917, %v1923
        %vm1926 = vcmask 162816
        %v1927 = vsel %vm1926, %v1925, -inf
        %1928 = vmax.xlane.f32.xlu0 %v1927
        %v1929 = vpop.xlane.xlu0 %1928
        %v1930 = vsub.f32 %v1925, %v1929
        %v1931 = vmul.f32 %v1930, 1.442695
        %v1932 = vpow.pop %v1931
        %v1933 = vsel %vm1926, %v1932, 0.0
        %1934 = vadd.xlane.f32.xlu0 %v1933
        %v1935 = vpop.xlane.xlu0 %1934
        %v1936 = vrcp.pop %v1935
        %v1937 = vmul.f32 %v1932, %v1936
        %1938 = vst.msk [vmem:[%s217] sm:$0xff] %vm1926, %v1937
        %s1939 = sand.u32 %s137, 1
        %s1940 = scalar_lea.sflag [#allocation4], %s1939
        %s1941 = sand.u32 %s137, 1
        %s1942 = smul.addr %s1941, 8
        %s1943 = scalar_lea.vmem [#allocation3], %s1942
        // Predicated region
        $region41: #{convnet_forward.1} parent=39 // pred_check
          %p1944 = pneg %p147
        $region42: #{convnet_forward.1} parent=39 // pred_check_branch
          %1946 = sbr.rel (%p1944) target = $region44
        $region43: #{convnet_forward.1} parent=39 // pred_region
          %s1948 = ssub.s32 128, 128
          %1949 = vsyncadd %s1940, %s1948
          %s1950 = smul.addr %s19, 128
          %s1951 = scalar_lea.hbm %s5, %s1950
          %s1953 = sshll.u32 %s1943, 4
          %s1954 = int_to_ptr.vmem [resolvable:$true] %s1953
          %1956 = dma.vmem_to_hbm [thread:$0]  %s1954, 128, %s1951, %s1940
        $region44: #{convnet_forward.1} parent=39 // pred_fallthru
          _
      $region40: #{convnet_forward.1} parent=5 // pred_fallthru
        _
      %p1957 = scmp.le.s32.totalorder 2, %s14
      // Predicated region
      $region45: #{convnet_forward.1} parent=5 // pred_check
        %p1958 = pneg %p1957
      $region46: #{convnet_forward.1} parent=5 // pred_check_branch
        %1960 = sbr.rel (%p1958) target = $region48
      $region47: #{convnet_forward.1} parent=5 // pred_region
        %s1961 = ssub.s32 %s14, 2
        // Predicated region
        $region49: #{convnet_forward.1} parent=47 // pred_check
          %p1962 = pneg %p153
        $region50: #{convnet_forward.1} parent=47 // pred_check_branch
          %1964 = sbr.rel (%p1962) target = $region52
        $region51: #{convnet_forward.1} parent=47 // pred_region
          %s1965 = sand.u32 %s138, 1
          %s1966 = scalar_lea.sflag [#allocation4], %s1965
          %s1967 = sand.u32 %s138, 1
          %s1968 = smul.addr %s1967, 8
          %s1969 = scalar_lea.vmem [#allocation3], %s1968
          %1970 = dma.done %s1966, 128
        $region52: #{convnet_forward.1} parent=47 // pred_fallthru
          _
      $region48: #{convnet_forward.1} parent=5 // pred_fallthru
        _
    $region6: #{convnet_forward.1} parent=1 // loop_footer
      %s18 = sadd.s32 1, %s14
    $region7: #{convnet_forward.1} parent=1 // loop_footer_branch
      %13 = sbr.rel target = $region3
    $region8: #{convnet_forward.1} parent=1 // loop_exit
      _
    %1971 = vsyncpa [#allocation4], 1
    %s1972 = scalar_lea.sflag [#allocation4], 1
    %1973 = vsyncpa %s1972, 1

</llo_original>
